<compile_context>
chip_gen: v7x
topology: tpu7x:2x2x1
jax: 0.10.0
libtpu: 0.0.40
codegen_flags: <defaults>
</compile_context>

<pallas_src>
import math

import jax
import jax.numpy as jnp
from jax.experimental import pallas as pl
from jax.experimental.pallas import tpu as pltpu

# ---------------- small synthetic config ----------------
B = 2                   # batch_size
S = 16                  # seq_len (== static routed capacity)
D = 32                  # transformer_dim
E = 4                   # attn_n_experts == num_heads
HD = D // E             # head_dim = 8
NOPE = HD // 2          # qk_nope_head_dim = 4
ROPE = HD // 2          # qk_rope_head_dim = 4
FREQS_DIM = ROPE * E    # 16
TOPK = 2
CAPACITY_FACTOR = 1.0
EPSILON = 1e-6
NEG = -1.0e6            # additive mask magnitude (matches reference)

QKV_W = 3 * E * HD      # 96 real projection columns: [Q(32) | K(32) | V(32)]
WPAD = 128              # lane-dense padded width (also padded output width)
W_ALL = 2 * WPAD        # main block + RoPE rotation-partner block (256-wide MXU pass)


# ============================ fused Pallas kernel ============================

def _fused_attn_kernel(x_ref, w_ref, b_ref, cos_ref, sin_ref,
                       kbias_ref, qvalid_ref, nroute_ref,
                       wff_ref, bff_ref, o_ref):
    # One grid step == one batch element; all experts handled at once.
    #   x:      [S, D]        bf16
    #   w:      [D, 256]      bf16  packed [Q|K|V|pad | Qrot|Krot|pad]
    #   b:      [1, 256]      f32
    #   cos/sin:[S, 128]      f32   (1/0 over nope, V and pad columns)
    #   kbias:  [E, 1, S]     f32   additive key mask (0 valid / NEG invalid)
    #   qvalid: [E, S, 1]     f32   routed & unpadded query rows
    #   nroute: [S, 1]        f32   number of experts each token is routed to
    #   wff:    [E*HD, 128]   bf16  experts stacked along the contraction
    #   bff:    [1, 128]      f32
    #   o:      [S, 128]      f32   lane-dense output slab (real data in [:D])
    x = x_ref[...]

    # --- fused QKV (+ rotation partner) projection: one 256-wide MXU pass ---
    proj = jnp.dot(x, w_ref[...], preferred_element_type=jnp.float32) + b_ref[...]
    main = proj[:, :WPAD]          # 128-aligned slice (vreg select, no shuffle)
    rotp = proj[:, WPAD:]          # 128-aligned slice

    # --- RoPE as a single full-width FMA (no narrow lane slices) ---
    qkv = main * cos_ref[...] + rotp * sin_ref[...]            # [S, 128] f32

    # --- per-expert attention (nope+pe merged into one HD=8 contraction) ---
    dn = (((1,), (1,)), ((), ()))       # contract last dims; no transpose materialized
    ctx_parts = []
    for e in range(E):                  # static unroll; per-expert matmuls are inherent
        q_e = qkv[:, e * HD:(e + 1) * HD]
        k_e = qkv[:, E * HD + e * HD:E * HD + (e + 1) * HD]
        v_e = qkv[:, 2 * E * HD + e * HD:2 * E * HD + (e + 1) * HD]
        s_e = jax.lax.dot_general(q_e.astype(jnp.bfloat16), k_e.astype(jnp.bfloat16),
                                  dn, preferred_element_type=jnp.float32)   # [S, S]
        s_e = s_e + kbias_ref[e]                                # key mask
        m = jnp.max(s_e, axis=-1, keepdims=True)                # softmax in f32
        p = jnp.exp(s_e - m)
        den = jnp.sum(p, axis=-1, keepdims=True)
        p = p * pl.reciprocal(den, approx=True)                 # EUP slot (approx norm)
        ctx_e = jnp.dot(p.astype(jnp.bfloat16), v_e.astype(jnp.bfloat16),
                        preferred_element_type=jnp.float32)     # [S, HD]
        ctx_parts.append(ctx_e * qvalid_ref[e])                 # zero invalid query rows

    # --- output projection; expert combine folded into the E*HD contraction ---
    ctx_cat = jnp.concatenate(ctx_parts, axis=-1)               # [S, E*HD]
    out = jnp.dot(ctx_cat.astype(jnp.bfloat16), wff_ref[...],
                  preferred_element_type=jnp.float32)           # [S, 128] lane-dense
    o_ref[...] = out + bff_ref[...] * nroute_ref[...]           # bias x (#routed experts)


# ============================ plain-JAX glue ============================

def switch_gate(x, w_gate, b_gate):
    """SwitchGate.forward — route_mat [B, S, E].
    NOTE: normalization is over the batch axis (dim 0), exactly as in the reference."""
    logits = jnp.einsum("bsd,de->bse", x, w_gate) + b_gate
    gates = jax.nn.softmax(logits, axis=-1)
    _, top_idx = jax.lax.top_k(gates, TOPK)
    onehot = jnp.sum(jax.nn.one_hot(top_idx, E, dtype=gates.dtype), axis=-2)
    masked = gates * onehot
    denom = jnp.sum(masked, axis=0, keepdims=True) + EPSILON
    capacity = int(CAPACITY_FACTOR * B)
    return masked / denom * capacity


def _rot_cols(w):
    """Pair-rotation partner along the last (ROPE) axis: (w0, w1) -> (-w1, w0)."""
    wp = w.reshape(*w.shape[:-1], ROPE // 2, 2)
    return jnp.stack([-wp[..., 1], wp[..., 0]], axis=-1).reshape(w.shape)


def _lane_block(w):
    """[E, D, HD] -> [D, E*HD] expert-major column block."""
    return jnp.transpose(w, (1, 0, 2)).reshape(D, E * HD)


def prepare_kernel_params(params):
    """Pack kernel weights ONCE (hoisted out of the per-call forward)."""
    scale = 1.0 / math.sqrt(HD)
    w_qkv, b_qkv = params["w_qkv"], params["b_qkv"]             # [E,D,3*HD], [E,3*HD]
    wq = w_qkv[..., :HD] * scale                                # 1/sqrt(HD) folded into Q
    wk = w_qkv[..., HD:2 * HD]
    wv = w_qkv[..., 2 * HD:]
    bq = b_qkv[..., :HD] * scale
    bk = b_qkv[..., HD:2 * HD]
    bv = b_qkv[..., 2 * HD:]

    def rotify(w):  # zero nope columns, pair-rotate pe columns
        return jnp.concatenate([jnp.zeros_like(w[..., :NOPE]),
                                _rot_cols(w[..., NOPE:])], axis=-1)

    zpad_main = jnp.zeros((D, WPAD - QKV_W), jnp.float32)
    zpad_rot = jnp.zeros((D, WPAD - 2 * E * HD), jnp.float32)
    w_main = jnp.concatenate(
        [_lane_block(wq), _lane_block(wk), _lane_block(wv), zpad_main], axis=-1)
    w_rot = jnp.concatenate(
        [_lane_block(rotify(wq)), _lane_block(rotify(wk)), zpad_rot], axis=-1)
    w_all = jnp.concatenate([w_main, w_rot], axis=-1)            # [D, 256]

    b_main = jnp.concatenate([bq.reshape(-1), bk.reshape(-1), bv.reshape(-1),
                              jnp.zeros((WPAD - QKV_W,), jnp.float32)])
    b_rot = jnp.concatenate([rotify(bq).reshape(-1), rotify(bk).reshape(-1),
                             jnp.zeros((WPAD - 2 * E * HD,), jnp.float32)])
    b_all = jnp.concatenate([b_main, b_rot]).reshape(1, W_ALL)

    w_ff = params["w_ff"].reshape(E * HD, D)                     # experts on contraction
    w_ff_cat = jnp.concatenate(
        [w_ff, jnp.zeros((E * HD, WPAD - D), jnp.float32)], axis=-1)          # [32, 128]
    b_ff = jnp.concatenate(
        [params["b_ff"], jnp.zeros((WPAD - D,), jnp.float32)]).reshape(1, WPAD)

    return {
        "w_gate": params["w_gate"], "b_gate": params["b_gate"],
        "w_all": w_all.astype(jnp.bfloat16),     # MXU operands in bf16
        "b_all": b_all.astype(jnp.float32),
        "w_ff": w_ff_cat.astype(jnp.bfloat16),
        "b_ff": b_ff.astype(jnp.float32),
    }


def _routing_tensors(route_mat, mask):
    """Static-shape routing tensors: full-width RoPE cos/sin, additive key mask,
    query-validity mask and per-token routed-expert count."""
    routed = jnp.transpose(route_mat, (2, 0, 1)) > 0.0           # [E, B, S]
    valid = routed & (mask[None, :, :] > 0.0)                    # [E, B, S]
    rank = jnp.maximum(jnp.cumsum(routed.astype(jnp.int32), axis=-1) - 1, 0)

    ar = jnp.arange(0, FREQS_DIM, 2)[: FREQS_DIM // 2].astype(jnp.float32)
    inv_freq = (1.0 / (10000.0 ** (ar / FREQS_DIM))).reshape(E, ROPE // 2)
    ang = rank.astype(jnp.float32)[..., None] * inv_freq[:, None, None, :]
    cos = jnp.repeat(jnp.cos(ang), 2, axis=-1)                   # [E,B,S,ROPE]
    sin = jnp.repeat(jnp.sin(ang), 2, axis=-1)

    cos_h = jnp.concatenate([jnp.ones((E, B, S, NOPE), jnp.float32), cos], axis=-1)
    sin_h = jnp.concatenate([jnp.zeros((E, B, S, NOPE), jnp.float32), sin], axis=-1)
    cos_qk = jnp.transpose(cos_h, (1, 2, 0, 3)).reshape(B, S, E * HD)
    sin_qk = jnp.transpose(sin_h, (1, 2, 0, 3)).reshape(B, S, E * HD)
    # layout matches W_all main block: [Q(32) | K(32) | V(32) | pad(32)]
    cosp = jnp.concatenate(
        [cos_qk, cos_qk, jnp.ones((B, S, WPAD - 2 * E * HD), jnp.float32)], axis=-1)
    sinp = jnp.concatenate(
        [sin_qk, sin_qk, jnp.zeros((B, S, WPAD - 2 * E * HD), jnp.float32)], axis=-1)

    kbias = jnp.where(valid, 0.0, NEG).astype(jnp.float32)       # [E,B,S]
    kbias = jnp.transpose(kbias, (1, 0, 2)).reshape(B, E, 1, S)
    qvalid = jnp.transpose(valid.astype(jnp.float32), (1, 0, 2)).reshape(B, E, S, 1)
    nroute = jnp.sum(qvalid, axis=1)                             # [B, S, 1]
    return cosp, sinp, kbias, qvalid, nroute


def sparse_self_attention_forward(prep, x, mask):
    """SparseSelfAttention.forward: x [B,S,D] f32, mask [B,S] -> [B,S,D] f32."""
    route = switch_gate(x, prep["w_gate"], prep["b_gate"])       # [B, S, E]
    cosp, sinp, kbias, qvalid, nroute = _routing_tensors(route, mask)
    x_bf = x.astype(jnp.bfloat16)                                # bf16 MXU operand

    def full_spec(shape):
        return pl.BlockSpec(shape, lambda b, _n=len(shape): (0,) * _n)

    def per_batch(shape):
        return pl.BlockSpec((None,) + shape,
                            lambda b, _n=len(shape): (b,) + (0,) * _n)

    out = pl.pallas_call(
        _fused_attn_kernel,
        grid=(B,),
        out_shape=jax.ShapeDtypeStruct((B, S, WPAD), jnp.float32),
        in_specs=[
            per_batch((S, D)),             # x
            full_spec((D, W_ALL)),         # w_all   (constant index -> fetched once)
            full_spec((1, W_ALL)),         # b_all
            per_batch((S, WPAD)),          # cos
            per_batch((S, WPAD)),          # sin
            per_batch((E, 1, S)),          # kbias
            per_batch((E, S, 1)),          # qvalid
            per_batch((S, 1)),             # nroute
            full_spec((E * HD, WPAD)),     # w_ff
            full_spec((1, WPAD)),          # b_ff
        ],
        out_specs=per_batch((S, WPAD)),
        compiler_params=pltpu.CompilerParams(
            dimension_semantics=("parallel",)),   # v7x: shard batch across TensorCores
    )(x_bf, prep["w_all"], prep["b_all"], cosp, sinp, kbias, qvalid, nroute,
      prep["w_ff"], prep["b_ff"])
    return out[:, :, :D]                          # drop lane padding outside the kernel


def init_params(key):
    keys = jax.random.split(key, 5)
    s = 0.02
    return {
        "w_gate": jax.random.normal(keys[0], (D, E), jnp.float32) * s,
        "b_gate": jnp.zeros((E,), jnp.float32),
        "w_qkv": jax.random.normal(keys[1], (E, D, 3 * HD), jnp.float32) * s,
        "b_qkv": jax.random.normal(keys[2], (E, 3 * HD), jnp.float32) * s,
        "w_ff": jax.random.normal(keys[3], (E, HD, D), jnp.float32) * s,
        "b_ff": jax.random.normal(keys[4], (D,), jnp.float32) * s,
    }


if __name__ == "__main__":
    key = jax.random.PRNGKey(0)
    pk, xk = jax.random.split(key)
    params = init_params(pk)
    prep = prepare_kernel_params(params)          # packed once, not per forward call
    x = jax.random.normal(xk, (B, S, D), jnp.float32)
    mask = jnp.ones((B, S), jnp.float32).at[1, S - 2:].set(0.0)

    fwd = jax.jit(sparse_self_attention_forward)  # static shapes -> fully jittable
    out = jax.block_until_ready(fwd(prep, x, mask))
    assert out.shape == (B, S, D) and out.dtype == jnp.float32
    assert bool(jnp.all(jnp.isfinite(out)))
    print("KERNEL_OK")
</pallas_src>

<mosaic_0001>
module attributes {stable_mosaic.version = 11 : i64} {
  func.func @_fused_attn_kernel(%arg0: i32, %arg1: memref<1x16x32xbf16, #tpu.memory_space<vmem>>, %arg2: memref<32x256xbf16, #tpu.memory_space<vmem>>, %arg3: memref<1x256xf32, #tpu.memory_space<vmem>>, %arg4: memref<1x16x128xf32, #tpu.memory_space<vmem>>, %arg5: memref<1x16x128xf32, #tpu.memory_space<vmem>>, %arg6: memref<1x4x1x16xf32, #tpu.memory_space<vmem>>, %arg7: memref<1x4x16x1xf32, #tpu.memory_space<vmem>>, %arg8: memref<1x16x1xf32, #tpu.memory_space<vmem>>, %arg9: memref<32x128xbf16, #tpu.memory_space<vmem>>, %arg10: memref<1x128xf32, #tpu.memory_space<vmem>>, %arg11: memref<1x16x128xf32, #tpu.memory_space<vmem>>) attributes {dimension_semantics = [#tpu.dimension_semantics<parallel>], iteration_bounds = array<i64: 2>, scalar_prefetch = 0 : i64, scratch_operands = 0 : i64, tpu.core_type = #tpu.core_type<tc>, window_params = [{transform_indices = @transform_0, window_bounds = array<i64: 1, 16, 32>}, {pipeline_mode = #tpu.pipeline_mode<synchronous>, transform_indices = @transform_1, window_bounds = array<i64: 32, 256>}, {pipeline_mode = #tpu.pipeline_mode<synchronous>, transform_indices = @transform_2, window_bounds = array<i64: 1, 256>}, {transform_indices = @transform_3, window_bounds = array<i64: 1, 16, 128>}, {transform_indices = @transform_4, window_bounds = array<i64: 1, 16, 128>}, {transform_indices = @transform_5, window_bounds = array<i64: 1, 4, 1, 16>}, {transform_indices = @transform_6, window_bounds = array<i64: 1, 4, 16, 1>}, {transform_indices = @transform_7, window_bounds = array<i64: 1, 16, 1>}, {pipeline_mode = #tpu.pipeline_mode<synchronous>, transform_indices = @transform_8, window_bounds = array<i64: 32, 128>}, {pipeline_mode = #tpu.pipeline_mode<synchronous>, transform_indices = @transform_9, window_bounds = array<i64: 1, 128>}, {transform_indices = @transform_10, window_bounds = array<i64: 1, 16, 128>}]} {
    %c0 = arith.constant 0 : index
    %c0_0 = arith.constant 0 : index
    %c0_1 = arith.constant 0 : index
    %0 = vector.load %arg1[%c0, %c0_0, %c0_1] : memref<1x16x32xbf16, #tpu.memory_space<vmem>>, vector<1x16x32xbf16>
    %1 = vector.shape_cast %0 : vector<1x16x32xbf16> to vector<16x32xbf16>
    %c0_2 = arith.constant 0 : index
    %c0_3 = arith.constant 0 : index
    %2 = vector.load %arg2[%c0_2, %c0_3] : memref<32x256xbf16, #tpu.memory_space<vmem>>, vector<32x256xbf16>
    %cst = arith.constant dense<0.000000e+00> : vector<16x256xf32>
    %3 = tpu.matmul %1, %2, %cst {dimension_numbers = #tpu.dot_dimension_numbers<[1], [0], [0], [1], [0, 0, 1, 1], [], []>} : vector<16x32xbf16>, vector<32x256xbf16>, vector<16x256xf32> -> vector<16x256xf32>
    %c0_4 = arith.constant 0 : index
    %c0_5 = arith.constant 0 : index
    %4 = vector.load %arg3[%c0_4, %c0_5] : memref<1x256xf32, #tpu.memory_space<vmem>>, vector<1x256xf32>
    %5 = vector.broadcast %4 : vector<1x256xf32> to vector<16x256xf32>
    %6 = arith.addf %3, %5 : vector<16x256xf32>
    %7 = vector.extract_strided_slice %6 {offsets = [0, 0], sizes = [16, 128], strides = [1, 1]} : vector<16x256xf32> to vector<16x128xf32>
    %8 = vector.extract_strided_slice %6 {offsets = [0, 128], sizes = [16, 128], strides = [1, 1]} : vector<16x256xf32> to vector<16x128xf32>
    %c0_6 = arith.constant 0 : index
    %c0_7 = arith.constant 0 : index
    %c0_8 = arith.constant 0 : index
    %9 = vector.load %arg4[%c0_6, %c0_7, %c0_8] : memref<1x16x128xf32, #tpu.memory_space<vmem>>, vector<1x16x128xf32>
    %10 = vector.shape_cast %9 : vector<1x16x128xf32> to vector<16x128xf32>
    %11 = arith.mulf %7, %10 : vector<16x128xf32>
    %c0_9 = arith.constant 0 : index
    %c0_10 = arith.constant 0 : index
    %c0_11 = arith.constant 0 : index
    %12 = vector.load %arg5[%c0_9, %c0_10, %c0_11] : memref<1x16x128xf32, #tpu.memory_space<vmem>>, vector<1x16x128xf32>
    %13 = vector.shape_cast %12 : vector<1x16x128xf32> to vector<16x128xf32>
    %14 = arith.mulf %8, %13 : vector<16x128xf32>
    %15 = arith.addf %11, %14 : vector<16x128xf32>
    %16 = vector.extract_strided_slice %15 {offsets = [0, 0], sizes = [16, 8], strides = [1, 1]} : vector<16x128xf32> to vector<16x8xf32>
    %17 = vector.extract_strided_slice %15 {offsets = [0, 32], sizes = [16, 8], strides = [1, 1]} : vector<16x128xf32> to vector<16x8xf32>
    %18 = vector.extract_strided_slice %15 {offsets = [0, 64], sizes = [16, 8], strides = [1, 1]} : vector<16x128xf32> to vector<16x8xf32>
    %19 = arith.truncf %16 : vector<16x8xf32> to vector<16x8xbf16>
    %20 = arith.truncf %17 : vector<16x8xf32> to vector<16x8xbf16>
    %cst_12 = arith.constant dense<0.000000e+00> : vector<16x16xf32>
    %21 = tpu.matmul %19, %20, %cst_12 {dimension_numbers = #tpu.dot_dimension_numbers<[1], [1], [0], [0], [0, 0, 1, 0], [], []>} : vector<16x8xbf16>, vector<16x8xbf16>, vector<16x16xf32> -> vector<16x16xf32>
    %c0_13 = arith.constant 0 : index
    %c0_14 = arith.constant 0 : index
    %c0_15 = arith.constant 0 : index
    %c0_16 = arith.constant 0 : index
    %22 = vector.load %arg6[%c0_13, %c0_14, %c0_15, %c0_16] : memref<1x4x1x16xf32, #tpu.memory_space<vmem>>, vector<1x1x1x16xf32>
    %23 = vector.shape_cast %22 : vector<1x1x1x16xf32> to vector<1x16xf32>
    %24 = vector.broadcast %23 : vector<1x16xf32> to vector<16x16xf32>
    %25 = arith.addf %21, %24 : vector<16x16xf32>
    %cst_17 = arith.constant dense<0xFF800000> : vector<16xf32>
    %26 = vector.multi_reduction <maximumf>, %25, %cst_17 [1] : vector<16x16xf32> to vector<16xf32>
    %27 = vector.shape_cast %26 : vector<16xf32> to vector<16x1xf32>
    %28 = vector.broadcast %27 : vector<16x1xf32> to vector<16x16xf32>
    %29 = arith.subf %25, %28 : vector<16x16xf32>
    %30 = math.exp %29 : vector<16x16xf32>
    %cst_18 = arith.constant dense<0.000000e+00> : vector<16xf32>
    %31 = vector.multi_reduction <add>, %30, %cst_18 [1] : vector<16x16xf32> to vector<16xf32>
    %32 = vector.shape_cast %31 : vector<16xf32> to vector<16x1xf32>
    %33 = tpu.reciprocal %32 {approx = true} : vector<16x1xf32> -> vector<16x1xf32>
    %34 = vector.broadcast %33 : vector<16x1xf32> to vector<16x16xf32>
    %35 = arith.mulf %30, %34 : vector<16x16xf32>
    %36 = arith.truncf %35 : vector<16x16xf32> to vector<16x16xbf16>
    %37 = arith.truncf %18 : vector<16x8xf32> to vector<16x8xbf16>
    %cst_19 = arith.constant dense<0.000000e+00> : vector<16x8xf32>
    %38 = tpu.matmul %36, %37, %cst_19 {dimension_numbers = #tpu.dot_dimension_numbers<[1], [0], [0], [1], [0, 0, 1, 1], [], []>} : vector<16x16xbf16>, vector<16x8xbf16>, vector<16x8xf32> -> vector<16x8xf32>
    %c0_20 = arith.constant 0 : index
    %c0_21 = arith.constant 0 : index
    %c0_22 = arith.constant 0 : index
    %c0_23 = arith.constant 0 : index
    %39 = vector.load %arg7[%c0_20, %c0_21, %c0_22, %c0_23] : memref<1x4x16x1xf32, #tpu.memory_space<vmem>>, vector<1x1x16x1xf32>
    %40 = vector.shape_cast %39 : vector<1x1x16x1xf32> to vector<16x1xf32>
    %41 = vector.broadcast %40 : vector<16x1xf32> to vector<16x8xf32>
    %42 = arith.mulf %38, %41 : vector<16x8xf32>
    %43 = vector.extract_strided_slice %15 {offsets = [0, 8], sizes = [16, 8], strides = [1, 1]} : vector<16x128xf32> to vector<16x8xf32>
    %44 = vector.extract_strided_slice %15 {offsets = [0, 40], sizes = [16, 8], strides = [1, 1]} : vector<16x128xf32> to vector<16x8xf32>
    %45 = vector.extract_strided_slice %15 {offsets = [0, 72], sizes = [16, 8], strides = [1, 1]} : vector<16x128xf32> to vector<16x8xf32>
    %46 = arith.truncf %43 : vector<16x8xf32> to vector<16x8xbf16>
    %47 = arith.truncf %44 : vector<16x8xf32> to vector<16x8xbf16>
    %cst_24 = arith.constant dense<0.000000e+00> : vector<16x16xf32>
    %48 = tpu.matmul %46, %47, %cst_24 {dimension_numbers = #tpu.dot_dimension_numbers<[1], [1], [0], [0], [0, 0, 1, 0], [], []>} : vector<16x8xbf16>, vector<16x8xbf16>, vector<16x16xf32> -> vector<16x16xf32>
    %c0_25 = arith.constant 0 : index
    %c1 = arith.constant 1 : index
    %c0_26 = arith.constant 0 : index
    %c0_27 = arith.constant 0 : index
    %49 = vector.load %arg6[%c0_25, %c1, %c0_26, %c0_27] : memref<1x4x1x16xf32, #tpu.memory_space<vmem>>, vector<1x1x1x16xf32>
    %50 = vector.shape_cast %49 : vector<1x1x1x16xf32> to vector<1x16xf32>
    %51 = vector.broadcast %50 : vector<1x16xf32> to vector<16x16xf32>
    %52 = arith.addf %48, %51 : vector<16x16xf32>
    %cst_28 = arith.constant dense<0xFF800000> : vector<16xf32>
    %53 = vector.multi_reduction <maximumf>, %52, %cst_28 [1] : vector<16x16xf32> to vector<16xf32>
    %54 = vector.shape_cast %53 : vector<16xf32> to vector<16x1xf32>
    %55 = vector.broadcast %54 : vector<16x1xf32> to vector<16x16xf32>
    %56 = arith.subf %52, %55 : vector<16x16xf32>
    %57 = math.exp %56 : vector<16x16xf32>
    %cst_29 = arith.constant dense<0.000000e+00> : vector<16xf32>
    %58 = vector.multi_reduction <add>, %57, %cst_29 [1] : vector<16x16xf32> to vector<16xf32>
    %59 = vector.shape_cast %58 : vector<16xf32> to vector<16x1xf32>
    %60 = tpu.reciprocal %59 {approx = true} : vector<16x1xf32> -> vector<16x1xf32>
    %61 = vector.broadcast %60 : vector<16x1xf32> to vector<16x16xf32>
    %62 = arith.mulf %57, %61 : vector<16x16xf32>
    %63 = arith.truncf %62 : vector<16x16xf32> to vector<16x16xbf16>
    %64 = arith.truncf %45 : vector<16x8xf32> to vector<16x8xbf16>
    %cst_30 = arith.constant dense<0.000000e+00> : vector<16x8xf32>
    %65 = tpu.matmul %63, %64, %cst_30 {dimension_numbers = #tpu.dot_dimension_numbers<[1], [0], [0], [1], [0, 0, 1, 1], [], []>} : vector<16x16xbf16>, vector<16x8xbf16>, vector<16x8xf32> -> vector<16x8xf32>
    %c0_31 = arith.constant 0 : index
    %c1_32 = arith.constant 1 : index
    %c0_33 = arith.constant 0 : index
    %c0_34 = arith.constant 0 : index
    %66 = vector.load %arg7[%c0_31, %c1_32, %c0_33, %c0_34] : memref<1x4x16x1xf32, #tpu.memory_space<vmem>>, vector<1x1x16x1xf32>
    %67 = vector.shape_cast %66 : vector<1x1x16x1xf32> to vector<16x1xf32>
    %68 = vector.broadcast %67 : vector<16x1xf32> to vector<16x8xf32>
    %69 = arith.mulf %65, %68 : vector<16x8xf32>
    %70 = vector.extract_strided_slice %15 {offsets = [0, 16], sizes = [16, 8], strides = [1, 1]} : vector<16x128xf32> to vector<16x8xf32>
    %71 = vector.extract_strided_slice %15 {offsets = [0, 48], sizes = [16, 8], strides = [1, 1]} : vector<16x128xf32> to vector<16x8xf32>
    %72 = vector.extract_strided_slice %15 {offsets = [0, 80], sizes = [16, 8], strides = [1, 1]} : vector<16x128xf32> to vector<16x8xf32>
    %73 = arith.truncf %70 : vector<16x8xf32> to vector<16x8xbf16>
    %74 = arith.truncf %71 : vector<16x8xf32> to vector<16x8xbf16>
    %cst_35 = arith.constant dense<0.000000e+00> : vector<16x16xf32>
    %75 = tpu.matmul %73, %74, %cst_35 {dimension_numbers = #tpu.dot_dimension_numbers<[1], [1], [0], [0], [0, 0, 1, 0], [], []>} : vector<16x8xbf16>, vector<16x8xbf16>, vector<16x16xf32> -> vector<16x16xf32>
    %c0_36 = arith.constant 0 : index
    %c2 = arith.constant 2 : index
    %c0_37 = arith.constant 0 : index
    %c0_38 = arith.constant 0 : index
    %76 = vector.load %arg6[%c0_36, %c2, %c0_37, %c0_38] : memref<1x4x1x16xf32, #tpu.memory_space<vmem>>, vector<1x1x1x16xf32>
    %77 = vector.shape_cast %76 : vector<1x1x1x16xf32> to vector<1x16xf32>
    %78 = vector.broadcast %77 : vector<1x16xf32> to vector<16x16xf32>
    %79 = arith.addf %75, %78 : vector<16x16xf32>
    %cst_39 = arith.constant dense<0xFF800000> : vector<16xf32>
    %80 = vector.multi_reduction <maximumf>, %79, %cst_39 [1] : vector<16x16xf32> to vector<16xf32>
    %81 = vector.shape_cast %80 : vector<16xf32> to vector<16x1xf32>
    %82 = vector.broadcast %81 : vector<16x1xf32> to vector<16x16xf32>
    %83 = arith.subf %79, %82 : vector<16x16xf32>
    %84 = math.exp %83 : vector<16x16xf32>
    %cst_40 = arith.constant dense<0.000000e+00> : vector<16xf32>
    %85 = vector.multi_reduction <add>, %84, %cst_40 [1] : vector<16x16xf32> to vector<16xf32>
    %86 = vector.shape_cast %85 : vector<16xf32> to vector<16x1xf32>
    %87 = tpu.reciprocal %86 {approx = true} : vector<16x1xf32> -> vector<16x1xf32>
    %88 = vector.broadcast %87 : vector<16x1xf32> to vector<16x16xf32>
    %89 = arith.mulf %84, %88 : vector<16x16xf32>
    %90 = arith.truncf %89 : vector<16x16xf32> to vector<16x16xbf16>
    %91 = arith.truncf %72 : vector<16x8xf32> to vector<16x8xbf16>
    %cst_41 = arith.constant dense<0.000000e+00> : vector<16x8xf32>
    %92 = tpu.matmul %90, %91, %cst_41 {dimension_numbers = #tpu.dot_dimension_numbers<[1], [0], [0], [1], [0, 0, 1, 1], [], []>} : vector<16x16xbf16>, vector<16x8xbf16>, vector<16x8xf32> -> vector<16x8xf32>
    %c0_42 = arith.constant 0 : index
    %c2_43 = arith.constant 2 : index
    %c0_44 = arith.constant 0 : index
    %c0_45 = arith.constant 0 : index
    %93 = vector.load %arg7[%c0_42, %c2_43, %c0_44, %c0_45] : memref<1x4x16x1xf32, #tpu.memory_space<vmem>>, vector<1x1x16x1xf32>
    %94 = vector.shape_cast %93 : vector<1x1x16x1xf32> to vector<16x1xf32>
    %95 = vector.broadcast %94 : vector<16x1xf32> to vector<16x8xf32>
    %96 = arith.mulf %92, %95 : vector<16x8xf32>
    %97 = vector.extract_strided_slice %15 {offsets = [0, 24], sizes = [16, 8], strides = [1, 1]} : vector<16x128xf32> to vector<16x8xf32>
    %98 = vector.extract_strided_slice %15 {offsets = [0, 56], sizes = [16, 8], strides = [1, 1]} : vector<16x128xf32> to vector<16x8xf32>
    %99 = vector.extract_strided_slice %15 {offsets = [0, 88], sizes = [16, 8], strides = [1, 1]} : vector<16x128xf32> to vector<16x8xf32>
    %100 = arith.truncf %97 : vector<16x8xf32> to vector<16x8xbf16>
    %101 = arith.truncf %98 : vector<16x8xf32> to vector<16x8xbf16>
    %cst_46 = arith.constant dense<0.000000e+00> : vector<16x16xf32>
    %102 = tpu.matmul %100, %101, %cst_46 {dimension_numbers = #tpu.dot_dimension_numbers<[1], [1], [0], [0], [0, 0, 1, 0], [], []>} : vector<16x8xbf16>, vector<16x8xbf16>, vector<16x16xf32> -> vector<16x16xf32>
    %c0_47 = arith.constant 0 : index
    %c3 = arith.constant 3 : index
    %c0_48 = arith.constant 0 : index
    %c0_49 = arith.constant 0 : index
    %103 = vector.load %arg6[%c0_47, %c3, %c0_48, %c0_49] : memref<1x4x1x16xf32, #tpu.memory_space<vmem>>, vector<1x1x1x16xf32>
    %104 = vector.shape_cast %103 : vector<1x1x1x16xf32> to vector<1x16xf32>
    %105 = vector.broadcast %104 : vector<1x16xf32> to vector<16x16xf32>
    %106 = arith.addf %102, %105 : vector<16x16xf32>
    %cst_50 = arith.constant dense<0xFF800000> : vector<16xf32>
    %107 = vector.multi_reduction <maximumf>, %106, %cst_50 [1] : vector<16x16xf32> to vector<16xf32>
    %108 = vector.shape_cast %107 : vector<16xf32> to vector<16x1xf32>
    %109 = vector.broadcast %108 : vector<16x1xf32> to vector<16x16xf32>
    %110 = arith.subf %106, %109 : vector<16x16xf32>
    %111 = math.exp %110 : vector<16x16xf32>
    %cst_51 = arith.constant dense<0.000000e+00> : vector<16xf32>
    %112 = vector.multi_reduction <add>, %111, %cst_51 [1] : vector<16x16xf32> to vector<16xf32>
    %113 = vector.shape_cast %112 : vector<16xf32> to vector<16x1xf32>
    %114 = tpu.reciprocal %113 {approx = true} : vector<16x1xf32> -> vector<16x1xf32>
    %115 = vector.broadcast %114 : vector<16x1xf32> to vector<16x16xf32>
    %116 = arith.mulf %111, %115 : vector<16x16xf32>
    %117 = arith.truncf %116 : vector<16x16xf32> to vector<16x16xbf16>
    %118 = arith.truncf %99 : vector<16x8xf32> to vector<16x8xbf16>
    %cst_52 = arith.constant dense<0.000000e+00> : vector<16x8xf32>
    %119 = tpu.matmul %117, %118, %cst_52 {dimension_numbers = #tpu.dot_dimension_numbers<[1], [0], [0], [1], [0, 0, 1, 1], [], []>} : vector<16x16xbf16>, vector<16x8xbf16>, vector<16x8xf32> -> vector<16x8xf32>
    %c0_53 = arith.constant 0 : index
    %c3_54 = arith.constant 3 : index
    %c0_55 = arith.constant 0 : index
    %c0_56 = arith.constant 0 : index
    %120 = vector.load %arg7[%c0_53, %c3_54, %c0_55, %c0_56] : memref<1x4x16x1xf32, #tpu.memory_space<vmem>>, vector<1x1x16x1xf32>
    %121 = vector.shape_cast %120 : vector<1x1x16x1xf32> to vector<16x1xf32>
    %122 = vector.broadcast %121 : vector<16x1xf32> to vector<16x8xf32>
    %123 = arith.mulf %119, %122 : vector<16x8xf32>
    %124 = tpu.concatenate %42, %69, %96, %123 in 1 : vector<16x8xf32>, vector<16x8xf32>, vector<16x8xf32>, vector<16x8xf32> -> vector<16x32xf32>
    %125 = arith.truncf %124 : vector<16x32xf32> to vector<16x32xbf16>
    %c0_57 = arith.constant 0 : index
    %c0_58 = arith.constant 0 : index
    %126 = vector.load %arg9[%c0_57, %c0_58] : memref<32x128xbf16, #tpu.memory_space<vmem>>, vector<32x128xbf16>
    %cst_59 = arith.constant dense<0.000000e+00> : vector<16x128xf32>
    %127 = tpu.matmul %125, %126, %cst_59 {dimension_numbers = #tpu.dot_dimension_numbers<[1], [0], [0], [1], [0, 0, 1, 1], [], []>} : vector<16x32xbf16>, vector<32x128xbf16>, vector<16x128xf32> -> vector<16x128xf32>
    %c0_60 = arith.constant 0 : index
    %c0_61 = arith.constant 0 : index
    %128 = vector.load %arg10[%c0_60, %c0_61] : memref<1x128xf32, #tpu.memory_space<vmem>>, vector<1x128xf32>
    %c0_62 = arith.constant 0 : index
    %c0_63 = arith.constant 0 : index
    %c0_64 = arith.constant 0 : index
    %129 = vector.load %arg8[%c0_62, %c0_63, %c0_64] : memref<1x16x1xf32, #tpu.memory_space<vmem>>, vector<1x16x1xf32>
    %130 = vector.shape_cast %129 : vector<1x16x1xf32> to vector<16x1xf32>
    %131 = vector.broadcast %128 : vector<1x128xf32> to vector<16x128xf32>
    %132 = vector.broadcast %130 : vector<16x1xf32> to vector<16x128xf32>
    %133 = arith.mulf %131, %132 : vector<16x128xf32>
    %134 = arith.addf %127, %133 : vector<16x128xf32>
    %c0_65 = arith.constant 0 : index
    %c0_66 = arith.constant 0 : index
    %c0_67 = arith.constant 0 : index
    %135 = vector.load %arg11[%c0_65, %c0_66, %c0_67] : memref<1x16x128xf32, #tpu.memory_space<vmem>>, vector<1x16x128xf32>
    %136 = vector.shape_cast %135 : vector<1x16x128xf32> to vector<16x128xf32>
    %137 = vector.shape_cast %134 : vector<16x128xf32> to vector<1x16x128xf32>
    tpu.vector_store %arg11[%c0_65, %c0_66, %c0_67], %137 {strides = array<i32>} : memref<1x16x128xf32, #tpu.memory_space<vmem>>, vector<1x16x128xf32>,
    return
  }
  func.func @transform_0(%arg0: i32) -> (i32, i32, i32) {
    %c0_i32 = arith.constant 0 : i32
    %c0_i32_0 = arith.constant 0 : i32
    %c0_i32_1 = arith.constant 0 : i32
    return %arg0, %c0_i32, %c0_i32_0 : i32, i32, i32
  }
  func.func @transform_1(%arg0: i32) -> (i32, i32) {
    %c0_i32 = arith.constant 0 : i32
    %c0_i32_0 = arith.constant 0 : i32
    %c0_i32_1 = arith.constant 0 : i32
    return %c0_i32, %c0_i32_0 : i32, i32
  }
  func.func @transform_2(%arg0: i32) -> (i32, i32) {
    %c0_i32 = arith.constant 0 : i32
    %c0_i32_0 = arith.constant 0 : i32
    %c0_i32_1 = arith.constant 0 : i32
    return %c0_i32, %c0_i32_0 : i32, i32
  }
  func.func @transform_3(%arg0: i32) -> (i32, i32, i32) {
    %c0_i32 = arith.constant 0 : i32
    %c0_i32_0 = arith.constant 0 : i32
    %c0_i32_1 = arith.constant 0 : i32
    return %arg0, %c0_i32, %c0_i32_0 : i32, i32, i32
  }
  func.func @transform_4(%arg0: i32) -> (i32, i32, i32) {
    %c0_i32 = arith.constant 0 : i32
    %c0_i32_0 = arith.constant 0 : i32
    %c0_i32_1 = arith.constant 0 : i32
    return %arg0, %c0_i32, %c0_i32_0 : i32, i32, i32
  }
  func.func @transform_5(%arg0: i32) -> (i32, i32, i32, i32) {
    %c0_i32 = arith.constant 0 : i32
    %c0_i32_0 = arith.constant 0 : i32
    %c0_i32_1 = arith.constant 0 : i32
    %c0_i32_2 = arith.constant 0 : i32
    return %arg0, %c0_i32, %c0_i32_0, %c0_i32_1 : i32, i32, i32, i32
  }
  func.func @transform_6(%arg0: i32) -> (i32, i32, i32, i32) {
    %c0_i32 = arith.constant 0 : i32
    %c0_i32_0 = arith.constant 0 : i32
    %c0_i32_1 = arith.constant 0 : i32
    %c0_i32_2 = arith.constant 0 : i32
    return %arg0, %c0_i32, %c0_i32_0, %c0_i32_1 : i32, i32, i32, i32
  }
  func.func @transform_7(%arg0: i32) -> (i32, i32, i32) {
    %c0_i32 = arith.constant 0 : i32
    %c0_i32_0 = arith.constant 0 : i32
    %c0_i32_1 = arith.constant 0 : i32
    return %arg0, %c0_i32, %c0_i32_0 : i32, i32, i32
  }
  func.func @transform_8(%arg0: i32) -> (i32, i32) {
    %c0_i32 = arith.constant 0 : i32
    %c0_i32_0 = arith.constant 0 : i32
    %c0_i32_1 = arith.constant 0 : i32
    return %c0_i32, %c0_i32_0 : i32, i32
  }
  func.func @transform_9(%arg0: i32) -> (i32, i32) {
    %c0_i32 = arith.constant 0 : i32
    %c0_i32_0 = arith.constant 0 : i32
    %c0_i32_1 = arith.constant 0 : i32
    return %c0_i32, %c0_i32_0 : i32, i32
  }
  func.func @transform_10(%arg0: i32) -> (i32, i32, i32) {
    %c0_i32 = arith.constant 0 : i32
    %c0_i32_0 = arith.constant 0 : i32
    %c0_i32_1 = arith.constant 0 : i32
    return %arg0, %c0_i32, %c0_i32_0 : i32, i32, i32
  }
}

</mosaic_0001>

<llo_original>
// kernel: sparse_self_attention_forward.1
$region0: #{sparse_self_attention_forward.1}
  #allocation0 [shape = 'u32[]', space=smem, size = 0x4, offset = 0x4, fixed_abs, tag = 'smem constant byte address 0x4 - core index']
  #allocation1 [shape = 'u32[144,128]{1,0:T(1,128)}', space=vmem, size = 0x12000, scoped, tag = 'internal scratch']
  %s0 = inlined_call_operand.vmem [shape: bf16[2,16,32], index: 0, kind: input, shape index: {}]
  %s1 = inlined_call_operand.vmem [shape: bf16[32,256], index: 1, kind: input, shape index: {}]
  %s2 = inlined_call_operand.vmem [shape: f32[1,256], index: 2, kind: input, shape index: {}]
  %s3 = inlined_call_operand.vmem [shape: f32[2,16,128], index: 3, kind: input, shape index: {}]
  %s4 = inlined_call_operand.vmem [shape: f32[2,16,128], index: 4, kind: input, shape index: {}]
  %s5 = inlined_call_operand.vmem [shape: f32[2,4,1,16], index: 5, kind: input, shape index: {}]
  %s6 = inlined_call_operand.vmem [shape: f32[2,4,16,1], index: 6, kind: input, shape index: {}]
  %s7 = inlined_call_operand.vmem [shape: f32[2,16,1], index: 7, kind: input, shape index: {}]
  %s8 = inlined_call_operand.vmem [shape: bf16[32,128], index: 8, kind: input, shape index: {}]
  %s9 = inlined_call_operand.vmem [shape: f32[1,128], index: 9, kind: input, shape index: {}]
  %s10 = inlined_call_operand.hbm [shape: f32[2,16,128], index: 10, kind: output, shape index: {}]
  %s11 = sld [smem:[#allocation0]]
  $region73: #{sparse_self_attention_forward.1} parent=0
    _
  %s13 = ssub.s32 1, %s11
  %s14 = scalar_select 0, %s13, %s11
  $region1: #{sparse_self_attention_forward.1} parent=0
    #allocation2 [shape = 'u8[16384]{0}', space=vmem, size = 0x4000, scoped, tag = 'output window, operand 0']
    #allocation3 [shape = 's32[2]{0}', space=sflag, size = 0x8, scoped, tag = 'scoped memory for sparse_self_attention_forward.1']
    %15 = vsyncpa [#allocation3], 0
    %s16 = scalar_lea.sflag [#allocation3], 1
    %17 = vsyncpa %s16, 0
    loop: start=0, step=1, limit=4
    $region2: #{sparse_self_attention_forward.1} parent=1 // loop_pre_header
      _
    $region3: #{sparse_self_attention_forward.1} parent=1 // loop_header
      %s19 = sphi 0, %s23
      %p20 = scmp.ge.s32.totalorder %s19, 4
      %s29 = sphi 0, %s31
      %s32 = sphi 0, %s29
      %s33 = sphi 0, %s32
      %s49 = sphi 0, %s33
      %s53 = sphi 0, %s53
      %s55 = sphi 0, %s53
      %s56 = sphi 0, %s55
      %s70 = sphi 0, %s56
      %s74 = sphi 0, %s74
      %s76 = sphi 0, %s74
      %s77 = sphi 0, %s76
      %s91 = sphi 0, %s77
      %s97 = sphi 0, %s99
      %s100 = sphi 0, %s97
      %s101 = sphi 0, %s100
      %s117 = sphi 0, %s101
      %s123 = sphi 0, %s125
      %s126 = sphi 0, %s123
      %s127 = sphi 0, %s126
      %s143 = sphi 0, %s127
      %s149 = sphi 0, %s151
      %s152 = sphi 0, %s149
      %s153 = sphi 0, %s152
      %s169 = sphi 0, %s153
      %s175 = sphi 0, %s177
      %s178 = sphi 0, %s175
      %s179 = sphi 0, %s178
      %s195 = sphi 0, %s179
      %s201 = sphi 0, %s203
      %s204 = sphi 0, %s201
      %s205 = sphi 0, %s204
      %s221 = sphi 0, %s205
      %s225 = sphi 0, %s225
      %s227 = sphi 0, %s225
      %s228 = sphi 0, %s227
      %s242 = sphi 0, %s228
      %s246 = sphi 0, %s246
      %s248 = sphi 0, %s246
      %s249 = sphi 0, %s248
      %s263 = sphi 0, %s249
      %s269 = sphi 0, %s271
      %s272 = sphi 0, %s269
      %s273 = sphi 0, %s272
      %s289 = sphi 0, %s273
    $region4: #{sparse_self_attention_forward.1} parent=1 // loop_header_branch
      %22 = sbr.rel (%p20) target = $region8
    $region5: #{sparse_self_attention_forward.1} parent=1 // loop_body
      %s24 = ssub.s32 %s19, 1
      %s25 = ssub.s32 %s19, 2
      %s26 = sadd.s32 %s19, 1
      %s27 = ssub.s32 %s19, %s26
      %p28 = scmp.eq.s32.totalorder %s27, 0
      %s30 = sadd.s32 %s29, 1
      %s31 = scalar_select %p28, %s29, %s30
      %p34 = pneg %p28
      %p35 = scmp.eq.s32.totalorder %s19, 1
      %p36 = por %p34, %p35
      %p37 = scmp.ne.s32.totalorder %s29, %s32
      %p38 = scmp.eq.s32.totalorder %s19, 0
      %p39 = por %p37, %p38
      %p40 = scmp.ne.s32.totalorder %s29, %s32
      %p41 = scmp.eq.s32.totalorder %s24, 1
      %p42 = por %p40, %p41
      %p43 = scmp.ne.s32.totalorder %s32, %s33
      %p44 = scmp.eq.s32.totalorder %s24, 0
      %p45 = por %p43, %p44
      %p46 = scmp.ne.s32.totalorder %s32, %s33
      %p47 = scmp.eq.s32.totalorder %s25, 1
      %p48 = por %p46, %p47
      %p50 = scmp.ne.s32.totalorder %s33, %s49
      %p51 = scmp.eq.s32.totalorder %s25, 0
      %p52 = por %p50, %p51
      %s54 = sadd.s32 %s53, 1
      %p57 = scmp.eq.s32.totalorder %s19, 1
      %p58 = scmp.ne.s32.totalorder %s53, %s55
      %p59 = scmp.eq.s32.totalorder %s19, 0
      %p60 = por %p58, %p59
      %p61 = scmp.ne.s32.totalorder %s53, %s55
      %p62 = scmp.eq.s32.totalorder %s24, 1
      %p63 = por %p61, %p62
      %p64 = scmp.ne.s32.totalorder %s55, %s56
      %p65 = scmp.eq.s32.totalorder %s24, 0
      %p66 = por %p64, %p65
      %p67 = scmp.ne.s32.totalorder %s55, %s56
      %p68 = scmp.eq.s32.totalorder %s25, 1
      %p69 = por %p67, %p68
      %p71 = scmp.ne.s32.totalorder %s56, %s70
      %p72 = scmp.eq.s32.totalorder %s25, 0
      %p73 = por %p71, %p72
      %s75 = sadd.s32 %s74, 1
      %p78 = scmp.eq.s32.totalorder %s19, 1
      %p79 = scmp.ne.s32.totalorder %s74, %s76
      %p80 = scmp.eq.s32.totalorder %s19, 0
      %p81 = por %p79, %p80
      %p82 = scmp.ne.s32.totalorder %s74, %s76
      %p83 = scmp.eq.s32.totalorder %s24, 1
      %p84 = por %p82, %p83
      %p85 = scmp.ne.s32.totalorder %s76, %s77
      %p86 = scmp.eq.s32.totalorder %s24, 0
      %p87 = por %p85, %p86
      %p88 = scmp.ne.s32.totalorder %s76, %s77
      %p89 = scmp.eq.s32.totalorder %s25, 1
      %p90 = por %p88, %p89
      %p92 = scmp.ne.s32.totalorder %s77, %s91
      %p93 = scmp.eq.s32.totalorder %s25, 0
      %p94 = por %p92, %p93
      %s95 = ssub.s32 %s19, %s26
      %p96 = scmp.eq.s32.totalorder %s95, 0
      %s98 = sadd.s32 %s97, 1
      %s99 = scalar_select %p96, %s97, %s98
      %p102 = pneg %p96
      %p103 = scmp.eq.s32.totalorder %s19, 1
      %p104 = por %p102, %p103
      %p105 = scmp.ne.s32.totalorder %s97, %s100
      %p106 = scmp.eq.s32.totalorder %s19, 0
      %p107 = por %p105, %p106
      %p108 = scmp.ne.s32.totalorder %s97, %s100
      %p109 = scmp.eq.s32.totalorder %s24, 1
      %p110 = por %p108, %p109
      %p111 = scmp.ne.s32.totalorder %s100, %s101
      %p112 = scmp.eq.s32.totalorder %s24, 0
      %p113 = por %p111, %p112
      %p114 = scmp.ne.s32.totalorder %s100, %s101
      %p115 = scmp.eq.s32.totalorder %s25, 1
      %p116 = por %p114, %p115
      %p118 = scmp.ne.s32.totalorder %s101, %s117
      %p119 = scmp.eq.s32.totalorder %s25, 0
      %p120 = por %p118, %p119
      %s121 = ssub.s32 %s19, %s26
      %p122 = scmp.eq.s32.totalorder %s121, 0
      %s124 = sadd.s32 %s123, 1
      %s125 = scalar_select %p122, %s123, %s124
      %p128 = pneg %p122
      %p129 = scmp.eq.s32.totalorder %s19, 1
      %p130 = por %p128, %p129
      %p131 = scmp.ne.s32.totalorder %s123, %s126
      %p132 = scmp.eq.s32.totalorder %s19, 0
      %p133 = por %p131, %p132
      %p134 = scmp.ne.s32.totalorder %s123, %s126
      %p135 = scmp.eq.s32.totalorder %s24, 1
      %p136 = por %p134, %p135
      %p137 = scmp.ne.s32.totalorder %s126, %s127
      %p138 = scmp.eq.s32.totalorder %s24, 0
      %p139 = por %p137, %p138
      %p140 = scmp.ne.s32.totalorder %s126, %s127
      %p141 = scmp.eq.s32.totalorder %s25, 1
      %p142 = por %p140, %p141
      %p144 = scmp.ne.s32.totalorder %s127, %s143
      %p145 = scmp.eq.s32.totalorder %s25, 0
      %p146 = por %p144, %p145
      %s147 = ssub.s32 %s19, %s26
      %p148 = scmp.eq.s32.totalorder %s147, 0
      %s150 = sadd.s32 %s149, 1
      %s151 = scalar_select %p148, %s149, %s150
      %p154 = pneg %p148
      %p155 = scmp.eq.s32.totalorder %s19, 1
      %p156 = por %p154, %p155
      %p157 = scmp.ne.s32.totalorder %s149, %s152
      %p158 = scmp.eq.s32.totalorder %s19, 0
      %p159 = por %p157, %p158
      %p160 = scmp.ne.s32.totalorder %s149, %s152
      %p161 = scmp.eq.s32.totalorder %s24, 1
      %p162 = por %p160, %p161
      %p163 = scmp.ne.s32.totalorder %s152, %s153
      %p164 = scmp.eq.s32.totalorder %s24, 0
      %p165 = por %p163, %p164
      %p166 = scmp.ne.s32.totalorder %s152, %s153
      %p167 = scmp.eq.s32.totalorder %s25, 1
      %p168 = por %p166, %p167
      %p170 = scmp.ne.s32.totalorder %s153, %s169
      %p171 = scmp.eq.s32.totalorder %s25, 0
      %p172 = por %p170, %p171
      %s173 = ssub.s32 %s19, %s26
      %p174 = scmp.eq.s32.totalorder %s173, 0
      %s176 = sadd.s32 %s175, 1
      %s177 = scalar_select %p174, %s175, %s176
      %p180 = pneg %p174
      %p181 = scmp.eq.s32.totalorder %s19, 1
      %p182 = por %p180, %p181
      %p183 = scmp.ne.s32.totalorder %s175, %s178
      %p184 = scmp.eq.s32.totalorder %s19, 0
      %p185 = por %p183, %p184
      %p186 = scmp.ne.s32.totalorder %s175, %s178
      %p187 = scmp.eq.s32.totalorder %s24, 1
      %p188 = por %p186, %p187
      %p189 = scmp.ne.s32.totalorder %s178, %s179
      %p190 = scmp.eq.s32.totalorder %s24, 0
      %p191 = por %p189, %p190
      %p192 = scmp.ne.s32.totalorder %s178, %s179
      %p193 = scmp.eq.s32.totalorder %s25, 1
      %p194 = por %p192, %p193
      %p196 = scmp.ne.s32.totalorder %s179, %s195
      %p197 = scmp.eq.s32.totalorder %s25, 0
      %p198 = por %p196, %p197
      %s199 = ssub.s32 %s19, %s26
      %p200 = scmp.eq.s32.totalorder %s199, 0
      %s202 = sadd.s32 %s201, 1
      %s203 = scalar_select %p200, %s201, %s202
      %p206 = pneg %p200
      %p207 = scmp.eq.s32.totalorder %s19, 1
      %p208 = por %p206, %p207
      %p209 = scmp.ne.s32.totalorder %s201, %s204
      %p210 = scmp.eq.s32.totalorder %s19, 0
      %p211 = por %p209, %p210
      %p212 = scmp.ne.s32.totalorder %s201, %s204
      %p213 = scmp.eq.s32.totalorder %s24, 1
      %p214 = por %p212, %p213
      %p215 = scmp.ne.s32.totalorder %s204, %s205
      %p216 = scmp.eq.s32.totalorder %s24, 0
      %p217 = por %p215, %p216
      %p218 = scmp.ne.s32.totalorder %s204, %s205
      %p219 = scmp.eq.s32.totalorder %s25, 1
      %p220 = por %p218, %p219
      %p222 = scmp.ne.s32.totalorder %s205, %s221
      %p223 = scmp.eq.s32.totalorder %s25, 0
      %p224 = por %p222, %p223
      %s226 = sadd.s32 %s225, 1
      %p229 = scmp.eq.s32.totalorder %s19, 1
      %p230 = scmp.ne.s32.totalorder %s225, %s227
      %p231 = scmp.eq.s32.totalorder %s19, 0
      %p232 = por %p230, %p231
      %p233 = scmp.ne.s32.totalorder %s225, %s227
      %p234 = scmp.eq.s32.totalorder %s24, 1
      %p235 = por %p233, %p234
      %p236 = scmp.ne.s32.totalorder %s227, %s228
      %p237 = scmp.eq.s32.totalorder %s24, 0
      %p238 = por %p236, %p237
      %p239 = scmp.ne.s32.totalorder %s227, %s228
      %p240 = scmp.eq.s32.totalorder %s25, 1
      %p241 = por %p239, %p240
      %p243 = scmp.ne.s32.totalorder %s228, %s242
      %p244 = scmp.eq.s32.totalorder %s25, 0
      %p245 = por %p243, %p244
      %s247 = sadd.s32 %s246, 1
      %p250 = scmp.eq.s32.totalorder %s19, 1
      %p251 = scmp.ne.s32.totalorder %s246, %s248
      %p252 = scmp.eq.s32.totalorder %s19, 0
      %p253 = por %p251, %p252
      %p254 = scmp.ne.s32.totalorder %s246, %s248
      %p255 = scmp.eq.s32.totalorder %s24, 1
      %p256 = por %p254, %p255
      %p257 = scmp.ne.s32.totalorder %s248, %s249
      %p258 = scmp.eq.s32.totalorder %s24, 0
      %p259 = por %p257, %p258
      %p260 = scmp.ne.s32.totalorder %s248, %s249
      %p261 = scmp.eq.s32.totalorder %s25, 1
      %p262 = por %p260, %p261
      %p264 = scmp.ne.s32.totalorder %s249, %s263
      %p265 = scmp.eq.s32.totalorder %s25, 0
      %p266 = por %p264, %p265
      %s267 = ssub.s32 %s19, %s26
      %p268 = scmp.eq.s32.totalorder %s267, 0
      %s270 = sadd.s32 %s269, 1
      %s271 = scalar_select %p268, %s269, %s270
      %p274 = pneg %p268
      %p275 = scmp.eq.s32.totalorder %s19, 1
      %p276 = por %p274, %p275
      %p277 = scmp.ne.s32.totalorder %s269, %s272
      %p278 = scmp.eq.s32.totalorder %s19, 0
      %p279 = por %p277, %p278
      %p280 = scmp.ne.s32.totalorder %s269, %s272
      %p281 = scmp.eq.s32.totalorder %s24, 1
      %p282 = por %p280, %p281
      %p283 = scmp.ne.s32.totalorder %s272, %s273
      %p284 = scmp.eq.s32.totalorder %s24, 0
      %p285 = por %p283, %p284
      %p286 = scmp.ne.s32.totalorder %s272, %s273
      %p287 = scmp.eq.s32.totalorder %s25, 1
      %p288 = por %p286, %p287
      %p290 = scmp.ne.s32.totalorder %s273, %s289
      %p291 = scmp.eq.s32.totalorder %s25, 0
      %p292 = por %p290, %p291
      %p293 = scmp.le.s32.totalorder 1, %s19
      %p294 = scmp.lt.s32.totalorder %s19, 3
      %p295 = pnand %p293, %p294
      %p296 = pneg %p295
      // Predicated region
      $region9: #{sparse_self_attention_forward.1} parent=5 // pred_check
        _
      $region10: #{sparse_self_attention_forward.1} parent=5 // pred_check_branch
        %298 = sbr.rel (%p295) target = $region12
      $region11: #{sparse_self_attention_forward.1} parent=5 // pred_region
        %s299 = ssub.s32 %s19, 1
        // Predicated region
        $region13: #{sparse_self_attention_forward.1} parent=11 // pred_check
          %p300 = pneg %p66
        $region14: #{sparse_self_attention_forward.1} parent=11 // pred_check_branch
          %302 = sbr.rel (%p300) target = $region16
        $region15: #{sparse_self_attention_forward.1} parent=11 // pred_region
          _
        $region16: #{sparse_self_attention_forward.1} parent=11 // pred_fallthru
          _
        // Predicated region
        $region17: #{sparse_self_attention_forward.1} parent=11 // pred_check
          %p303 = pneg %p87
        $region18: #{sparse_self_attention_forward.1} parent=11 // pred_check_branch
          %305 = sbr.rel (%p303) target = $region20
        $region19: #{sparse_self_attention_forward.1} parent=11 // pred_region
          _
        $region20: #{sparse_self_attention_forward.1} parent=11 // pred_fallthru
          _
        // Predicated region
        $region21: #{sparse_self_attention_forward.1} parent=11 // pred_check
          %p306 = pneg %p238
        $region22: #{sparse_self_attention_forward.1} parent=11 // pred_check_branch
          %308 = sbr.rel (%p306) target = $region24
        $region23: #{sparse_self_attention_forward.1} parent=11 // pred_region
          _
        $region24: #{sparse_self_attention_forward.1} parent=11 // pred_fallthru
          _
        // Predicated region
        $region25: #{sparse_self_attention_forward.1} parent=11 // pred_check
          %p309 = pneg %p259
        $region26: #{sparse_self_attention_forward.1} parent=11 // pred_check_branch
          %311 = sbr.rel (%p309) target = $region28
        $region27: #{sparse_self_attention_forward.1} parent=11 // pred_region
          _
        $region28: #{sparse_self_attention_forward.1} parent=11 // pred_fallthru
          _
      $region12: #{sparse_self_attention_forward.1} parent=5 // pred_fallthru
        _
      %p312 = scmp.lt.s32.totalorder %s19, 2
      // Predicated region
      $region29: #{sparse_self_attention_forward.1} parent=5 // pred_check
        %p313 = pneg %p312
      $region30: #{sparse_self_attention_forward.1} parent=5 // pred_check_branch
        %315 = sbr.rel (%p313) target = $region32
      $region31: #{sparse_self_attention_forward.1} parent=5 // pred_region
        // Predicated region
        $region33: #{sparse_self_attention_forward.1} parent=31 // pred_check
          %p316 = pneg %p39
        $region34: #{sparse_self_attention_forward.1} parent=31 // pred_check_branch
          %318 = sbr.rel (%p316) target = $region36
        $region35: #{sparse_self_attention_forward.1} parent=31 // pred_region
          %p319 = scmp.lt.s32.totalorder %s19, 1
          %s320 = scalar_select %p319, %s19, 1
          %s321 = smul.addr %s320, 2
          %s322 = smul.addr %s321, 4
          %s323 = scalar_lea.vmem %s0, %s322
        $region36: #{sparse_self_attention_forward.1} parent=31 // pred_fallthru
          _
        // Predicated region
        $region37: #{sparse_self_attention_forward.1} parent=31 // pred_check
          %p324 = pneg %p107
        $region38: #{sparse_self_attention_forward.1} parent=31 // pred_check_branch
          %326 = sbr.rel (%p324) target = $region40
        $region39: #{sparse_self_attention_forward.1} parent=31 // pred_region
          %p327 = scmp.lt.s32.totalorder %s19, 1
          %s328 = scalar_select %p327, %s19, 1
          %s329 = smul.addr %s328, 2
          %s330 = smul.addr %s329, 8
          %s331 = scalar_lea.vmem %s3, %s330
        $region40: #{sparse_self_attention_forward.1} parent=31 // pred_fallthru
          _
        // Predicated region
        $region41: #{sparse_self_attention_forward.1} parent=31 // pred_check
          %p332 = pneg %p133
        $region42: #{sparse_self_attention_forward.1} parent=31 // pred_check_branch
          %334 = sbr.rel (%p332) target = $region44
        $region43: #{sparse_self_attention_forward.1} parent=31 // pred_region
          %p335 = scmp.lt.s32.totalorder %s19, 1
          %s336 = scalar_select %p335, %s19, 1
          %s337 = smul.addr %s336, 2
          %s338 = smul.addr %s337, 8
          %s339 = scalar_lea.vmem %s4, %s338
        $region44: #{sparse_self_attention_forward.1} parent=31 // pred_fallthru
          _
        // Predicated region
        $region45: #{sparse_self_attention_forward.1} parent=31 // pred_check
          %p340 = pneg %p159
        $region46: #{sparse_self_attention_forward.1} parent=31 // pred_check_branch
          %342 = sbr.rel (%p340) target = $region48
        $region47: #{sparse_self_attention_forward.1} parent=31 // pred_region
          %p343 = scmp.lt.s32.totalorder %s19, 1
          %s344 = scalar_select %p343, %s19, 1
          %s345 = smul.addr %s344, 4
          %s346 = scalar_lea.vmem %s5, %s345
        $region48: #{sparse_self_attention_forward.1} parent=31 // pred_fallthru
          _
        // Predicated region
        $region49: #{sparse_self_attention_forward.1} parent=31 // pred_check
          %p347 = pneg %p185
        $region50: #{sparse_self_attention_forward.1} parent=31 // pred_check_branch
          %349 = sbr.rel (%p347) target = $region52
        $region51: #{sparse_self_attention_forward.1} parent=31 // pred_region
          %p350 = scmp.lt.s32.totalorder %s19, 1
          %s351 = scalar_select %p350, %s19, 1
          %s352 = smul.addr %s351, 8
          %s353 = smul.addr %s352, 8
          %s354 = scalar_lea.vmem %s6, %s353
        $region52: #{sparse_self_attention_forward.1} parent=31 // pred_fallthru
          _
        // Predicated region
        $region53: #{sparse_self_attention_forward.1} parent=31 // pred_check
          %p355 = pneg %p211
        $region54: #{sparse_self_attention_forward.1} parent=31 // pred_check_branch
          %357 = sbr.rel (%p355) target = $region56
        $region55: #{sparse_self_attention_forward.1} parent=31 // pred_region
          %p358 = scmp.lt.s32.totalorder %s19, 1
          %s359 = scalar_select %p358, %s19, 1
          %s360 = smul.addr %s359, 2
          %s361 = smul.addr %s360, 8
          %s362 = scalar_lea.vmem %s7, %s361
        $region56: #{sparse_self_attention_forward.1} parent=31 // pred_fallthru
          _
      $region32: #{sparse_self_attention_forward.1} parent=5 // pred_fallthru
        _
      %p363 = scmp.le.s32.totalorder 1, %s19
      %p364 = scmp.lt.s32.totalorder %s19, 3
      %p365 = pnand %p363, %p364
      %p366 = pneg %p365
      // Predicated region
      $region57: #{sparse_self_attention_forward.1} parent=5 // pred_check
        _
      $region58: #{sparse_self_attention_forward.1} parent=5 // pred_check_branch
        %368 = sbr.rel (%p365) target = $region60
      $region59: #{sparse_self_attention_forward.1} parent=5 // pred_region
        %s369 = ssub.s32 %s19, 1
        %p370 = scmp.lt.s32.totalorder %s24, 1
        %s371 = scalar_select %p370, %s24, 1
        %s372 = smul.addr %s371, 2
        %s373 = smul.addr %s372, 4
        %s374 = scalar_lea.vmem %s0, %s373
        %p375 = pneg %p45
        %p376 = pneg %p42
        %p377 = pneg %p66
        %p378 = pneg %p63
        %p379 = pneg %p87
        %p380 = pneg %p84
        %p381 = scmp.lt.s32.totalorder %s24, 1
        %s382 = scalar_select %p381, %s24, 1
        %s383 = smul.addr %s382, 2
        %s384 = smul.addr %s383, 8
        %s385 = scalar_lea.vmem %s3, %s384
        %p386 = pneg %p113
        %p387 = pneg %p110
        %p388 = scmp.lt.s32.totalorder %s24, 1
        %s389 = scalar_select %p388, %s24, 1
        %s390 = smul.addr %s389, 2
        %s391 = smul.addr %s390, 8
        %s392 = scalar_lea.vmem %s4, %s391
        %p393 = pneg %p139
        %p394 = pneg %p136
        %p395 = scmp.lt.s32.totalorder %s24, 1
        %s396 = scalar_select %p395, %s24, 1
        %s397 = smul.addr %s396, 4
        %s398 = scalar_lea.vmem %s5, %s397
        %p399 = pneg %p165
        %p400 = pneg %p162
        %p401 = scmp.lt.s32.totalorder %s24, 1
        %s402 = scalar_select %p401, %s24, 1
        %s403 = smul.addr %s402, 8
        %s404 = smul.addr %s403, 8
        %s405 = scalar_lea.vmem %s6, %s404
        %p406 = pneg %p191
        %p407 = pneg %p188
        %p408 = scmp.lt.s32.totalorder %s24, 1
        %s409 = scalar_select %p408, %s24, 1
        %s410 = smul.addr %s409, 2
        %s411 = smul.addr %s410, 8
        %s412 = scalar_lea.vmem %s7, %s411
        %p413 = pneg %p217
        %p414 = pneg %p214
        %p415 = pneg %p238
        %p416 = pneg %p235
        %p417 = pneg %p259
        %p418 = pneg %p256
        %p419 = pneg %p285
        %p420 = pneg %p282
        %s421 = sand.u32 %s272, 1
        %s422 = scalar_lea.sflag [#allocation3], %s421
        %s423 = sand.u32 %s272, 1
        %s424 = smul.addr %s423, 16
        %s425 = scalar_lea.vmem [#allocation2], %s424
        %p426 = scmp.lt.s32.totalorder %s24, 1
        %s427 = scalar_select %p426, %s24, 1
        %s428 = smul.addr %s427, 2
        %s429 = smul.addr %s428, 4
        %s430 = scalar_lea.vmem %s0, %s429
        %p431 = scmp.lt.s32.totalorder %s24, 1
        %s432 = scalar_select %p431, %s24, 1
        %s433 = smul.addr %s432, 2
        %s434 = smul.addr %s433, 8
        %s435 = scalar_lea.vmem %s3, %s434
        %p436 = scmp.lt.s32.totalorder %s24, 1
        %s437 = scalar_select %p436, %s24, 1
        %s438 = smul.addr %s437, 2
        %s439 = smul.addr %s438, 8
        %s440 = scalar_lea.vmem %s4, %s439
        %p441 = scmp.lt.s32.totalorder %s24, 1
        %s442 = scalar_select %p441, %s24, 1
        %s443 = smul.addr %s442, 4
        %s444 = scalar_lea.vmem %s5, %s443
        %p445 = scmp.lt.s32.totalorder %s24, 1
        %s446 = scalar_select %p445, %s24, 1
        %s447 = smul.addr %s446, 8
        %s448 = smul.addr %s447, 8
        %s449 = scalar_lea.vmem %s6, %s448
        %p450 = scmp.lt.s32.totalorder %s24, 1
        %s451 = scalar_select %p450, %s24, 1
        %s452 = smul.addr %s451, 2
        %s453 = smul.addr %s452, 8
        %s454 = scalar_lea.vmem %s7, %s453
        %v456 = vld [vmem:[%s430] sm:$0xf]
        %v457 = vld [vmem:[%s430 + $0x4] sm:$0xf]
        %v458 = vld [vmem:[%s1] sm:$0xff]
        %v459 = vld [vmem:[%s1 + $0x8] sm:$0xff]
        %v460 = vld [vmem:[%s1 + $0x10] sm:$0xff]
        %v461 = vld [vmem:[%s1 + $0x18] sm:$0xff]
        %v462 = vld [vmem:[%s2] sm:$0x3]
        %v464 = vlaneseq
        %v465 = vshrl.u32 %v464, 7
        %v466 = vsub.s32 0, %v465
        %v467 = vrot.slane %v462, %v466
        %v468 = vlaneseq
        %v469 = vshrl.u32 %v468, 7
        %v470 = vsub.s32 1, %v469
        %v471 = vrot.slane %v462, %v470
        %v476 = vunpack.c.l.b16 %v456
        %v477 = vunpack.c.l.b16 %v457
        %v478 = vpack.c.b16 %v477, %v476
        %v483 = vunpack.c.l.b16 %v458
        %v484 = vunpack.c.h.b16 %v458
        %v485 = vunpack.c.l.b16 %v459
        %v486 = vunpack.c.h.b16 %v459
        %v487 = vunpack.c.l.b16 %v460
        %v488 = vunpack.c.h.b16 %v460
        %v489 = vunpack.c.l.b16 %v461
        %v490 = vunpack.c.h.b16 %v461
        %v491 = vpack.c.b16 %v485, %v483
        %v492 = vpack.c.b16 %v486, %v484
        %v493 = vpack.c.b16 %v489, %v487
        %v494 = vpack.c.b16 %v490, %v488
        %vm499 = vcmask 261120
        %v501 = vsel %vm499, %v478, 0
        %503 = vmatprep.subr.bf16.mxu0 %v492
        %504 = vmatpush1.bf16.msra.mxu0 %v491
        %505 = vmatprep.subr.bf16.mxu0 %v494
        %506 = vmatpush1.bf16.msra.mxu0 %v493
        %507 = vmatprep.subr.bf16.mxu0 0
        %508 = vmatpush1.bf16.msra.mxu0 0
        %509 = vmatprep.subr.bf16.mxu0 0
        %510 = vmatpush1.bf16.msra.mxu0 0
        %511 = vmatprep.subr.bf16.mxu0 0
        %512 = vmatpush1.bf16.msra.mxu0 0
        %513 = vmatprep.subr.bf16.mxu0 0
        %514 = vmatpush1.bf16.msra.mxu0 0
        %515 = vmatprep.subr.bf16.mxu0 0
        %516 = vmatpush1.bf16.msra.mxu0 0
        %517 = vmatprep.subr.bf16.mxu0 0
        %518 = vmatpush1.bf16.msra.mxu0 0
        %519 = vmatprep.subr.bf16.mxu0 0
        %520 = vmatpush1.bf16.msra.mxu0 0
        %521 = vmatprep.subr.bf16.mxu0 0
        %522 = vmatpush1.bf16.msra.mxu0 0
        %523 = vmatprep.subr.bf16.mxu0 0
        %524 = vmatpush1.bf16.msra.mxu0 0
        %525 = vmatprep.subr.bf16.mxu0 0
        %526 = vmatpush1.bf16.msra.mxu0 0
        %527 = vmatprep.subr.bf16.mxu0 0
        %528 = vmatpush1.bf16.msra.mxu0 0
        %529 = vmatprep.subr.bf16.mxu0 0
        %530 = vmatpush1.bf16.msra.mxu0 0
        %531 = vmatprep.subr.bf16.mxu0 0
        %532 = vmatpush1.bf16.msra.mxu0 0
        %533 = vmatprep.subr.bf16.mxu0 0
        %534 = vmatpush1.bf16.msra.mxu0 0
        %535 = vmatprep.mubr.bf16.mxu0 0
        %536 = vmatmul.mubr.bf16.gmra.mrb[0].mxu0 %v501
        %v537 = vpop.f32.mrb[0].mxu0
        %v538 = vadd.f32 %v467, %v537
        %v539 = vpop.f32.mrb[0].mxu0
        %v540 = vadd.f32 %v471, %v539
        %v541 = vpop.f32.mrb[0].mxu0
        %v542 = vadd.f32 %v467, %v541
        %v543 = vpop.f32.mrb[0].mxu0
        %v544 = vadd.f32 %v471, %v543
        %545 = vdwg.mxu0
        %v546 = vld [vmem:[%s435] sm:$0xff]
        %v547 = vld [vmem:[%s435 + $0x8] sm:$0xff]
        %v548 = vmul.f32 %v538, %v546
        %v549 = vmul.f32 %v542, %v547
        %v550 = vld [vmem:[%s440] sm:$0xff]
        %v551 = vld [vmem:[%s440 + $0x8] sm:$0xff]
        %v552 = vmul.f32 %v540, %v550
        %v553 = vmul.f32 %v544, %v551
        %v554 = vadd.f32 %v548, %v552
        %v555 = vadd.f32 %v549, %v553
        %v556 = vpack.c.bf16 %v555, %v554
        %v557 = vld [vmem:[%s444] sm:$0x1]
        %v559 = vlaneseq
        %v560 = vshrl.u32 %v559, 7
        %v561 = vsub.s32 0, %v560
        %v562 = vrot.slane %v557, %v561
        %565 = vrot.lane.b32.xlu0 %v556, 96
        %v566 = vpop.permute.xlu0 %565
        %vm567 = vcmask 64512
        %v569 = vsel %vm567, %v556, 0
        %v572 = vsel %vm567, %v566, 0
        %574 = vmatprep.subr.bf16.mxu0 0
        %575 = vmatpush1.bf16.xpose.msra.mxu0 %v572
        %576 = vmatprep.subr.bf16.mxu0 0
        %577 = vmatpush1.bf16.xpose.msra.mxu0 0
        %578 = vmatprep.subr.bf16.mxu0 0
        %579 = vmatpush1.bf16.xpose.msra.mxu0 0
        %580 = vmatprep.subr.bf16.mxu0 0
        %581 = vmatpush1.bf16.xpose.msra.mxu0 0
        %582 = vmatprep.subr.bf16.mxu0 0
        %583 = vmatpush1.bf16.xpose.msra.mxu0 0
        %584 = vmatprep.subr.bf16.mxu0 0
        %585 = vmatpush1.bf16.xpose.msra.mxu0 0
        %586 = vmatprep.subr.bf16.mxu0 0
        %587 = vmatpush1.bf16.xpose.msra.mxu0 0
        %588 = vmatprep.subr.bf16.mxu0 0
        %589 = vmatpush1.bf16.xpose.msra.mxu0 0
        %590 = vmatprep.subr.bf16.mxu0 0
        %591 = vmatpush1.bf16.xpose.msra.mxu0 0
        %592 = vmatprep.subr.bf16.mxu0 0
        %593 = vmatpush1.bf16.xpose.msra.mxu0 0
        %594 = vmatprep.subr.bf16.mxu0 0
        %595 = vmatpush1.bf16.xpose.msra.mxu0 0
        %596 = vmatprep.subr.bf16.mxu0 0
        %597 = vmatpush1.bf16.xpose.msra.mxu0 0
        %598 = vmatprep.subr.bf16.mxu0 0
        %599 = vmatpush1.bf16.xpose.msra.mxu0 0
        %600 = vmatprep.subr.bf16.mxu0 0
        %601 = vmatpush1.bf16.xpose.msra.mxu0 0
        %602 = vmatprep.subr.bf16.mxu0 0
        %603 = vmatpush1.bf16.xpose.msra.mxu0 0
        %604 = vmatprep.subr.bf16.mxu0 0
        %605 = vmatpush1.bf16.xpose.msra.mxu0 0
        %606 = vmatprep.mubr.bf16.mxu0 0
        %607 = vmatmul.mubr.bf16.gmra.mrb[0].mxu0 %v569
        %v608 = vpop.f32.mrb[0].mxu0
        %v609 = vadd.f32 %v562, %v608
        %v610 = vpop.f32.mrb[0].mxu0
        %v611 = vpop.f32.mrb[0].mxu0
        %v612 = vadd.f32 %v562, %v611
        %v613 = vpop.f32.mrb[0].mxu0
        %614 = vdwg.mxu0
        %vm615 = vcmask 130048
        %v616 = vsel %vm615, %v609, -inf
        %617 = vmax.xlane.f32.xlu0 %v616
        %v618 = vpop.xlane.xlu0 %617
        %v619 = vsel %vm615, %v612, -inf
        %620 = vmax.xlane.f32.xlu0 %v619
        %v621 = vpop.xlane.xlu0 %620
        %v622 = vsub.f32 %v609, %v618
        %v623 = vsub.f32 %v612, %v621
        %v624 = vmul.f32 %v622, 1.442695
        %v625 = vpow.pop %v624
        %v626 = vmul.f32 %v623, 1.442695
        %v627 = vpow.pop %v626
        %v628 = vsel %vm615, %v625, 0.0
        %629 = vadd.xlane.f32.xlu0 %v628
        %v630 = vpop.xlane.xlu0 %629
        %v631 = vsel %vm615, %v627, 0.0
        %632 = vadd.xlane.f32.xlu0 %v631
        %v633 = vpop.xlane.xlu0 %632
        %v634 = vrcp.pop %v630
        %v635 = vrcp.pop %v633
        %v636 = vmul.f32 %v625, %v634
        %v637 = vmul.f32 %v627, %v635
        %v638 = vpack.c.bf16 %v637, %v636
        %639 = vrot.lane.b32.xlu0 %v556, 64
        %v640 = vpop.permute.xlu0 %639
        %v643 = vsel %vm615, %v638, 0
        %645 = vmatprep.subr.bf16.mxu0 0
        %646 = vmatpush1.bf16.msra.mxu0 %v640
        %647 = vmatprep.subr.bf16.mxu0 0
        %648 = vmatpush1.bf16.msra.mxu0 0
        %649 = vmatprep.subr.bf16.mxu0 0
        %650 = vmatpush1.bf16.msra.mxu0 0
        %651 = vmatprep.subr.bf16.mxu0 0
        %652 = vmatpush1.bf16.msra.mxu0 0
        %653 = vmatprep.subr.bf16.mxu0 0
        %654 = vmatpush1.bf16.msra.mxu0 0
        %655 = vmatprep.subr.bf16.mxu0 0
        %656 = vmatpush1.bf16.msra.mxu0 0
        %657 = vmatprep.subr.bf16.mxu0 0
        %658 = vmatpush1.bf16.msra.mxu0 0
        %659 = vmatprep.subr.bf16.mxu0 0
        %660 = vmatpush1.bf16.msra.mxu0 0
        %661 = vmatprep.subr.bf16.mxu0 0
        %662 = vmatpush1.bf16.msra.mxu0 0
        %663 = vmatprep.subr.bf16.mxu0 0
        %664 = vmatpush1.bf16.msra.mxu0 0
        %665 = vmatprep.subr.bf16.mxu0 0
        %666 = vmatpush1.bf16.msra.mxu0 0
        %667 = vmatprep.subr.bf16.mxu0 0
        %668 = vmatpush1.bf16.msra.mxu0 0
        %669 = vmatprep.subr.bf16.mxu0 0
        %670 = vmatpush1.bf16.msra.mxu0 0
        %671 = vmatprep.subr.bf16.mxu0 0
        %672 = vmatpush1.bf16.msra.mxu0 0
        %673 = vmatprep.subr.bf16.mxu0 0
        %674 = vmatpush1.bf16.msra.mxu0 0
        %675 = vmatprep.subr.bf16.mxu0 0
        %676 = vmatpush1.bf16.msra.mxu0 0
        %677 = vmatprep.mubr.bf16.mxu0 0
        %678 = vmatmul.mubr.bf16.gmra.mrb[0].mxu0 %v643
        %v679 = vpop.f32.mrb[0].mxu0
        %v680 = vadd.f32 0.0, %v679
        %v681 = vpop.f32.mrb[0].mxu0
        %v682 = vpop.f32.mrb[0].mxu0
        %v683 = vadd.f32 0.0, %v682
        %v684 = vpop.f32.mrb[0].mxu0
        %685 = vdwg.mxu0
        %v686 = vld [vmem:[%s449] sm:$0xff]
        %v687 = vld [vmem:[%s449 + $0x8] sm:$0xff]
        %689 = vset.pattern.permute.xlu0 0
        %690 = vperm.xlu0 %689, %v686
        %v691 = vpop.permute.xlu0 %690
        %694 = vset.pattern.permute.xlu0 0
        %695 = vperm.xlu0 %694, %v687
        %v696 = vpop.permute.xlu0 %695
        %v698 = vmul.f32 %v680, %v691
        %v699 = vmul.f32 %v683, %v696
        %s700 = scalar_lea.vmem %s444, 1
        %v701 = vld [vmem:[%s700] sm:$0x1]
        %v703 = vlaneseq
        %v704 = vshrl.u32 %v703, 7
        %v705 = vsub.s32 0, %v704
        %v706 = vrot.slane %v701, %v705
        %708 = vrot.lane.b32.xlu0 %v556, 120
        %v709 = vpop.permute.xlu0 %708
        %710 = vrot.lane.b32.xlu0 %v556, 88
        %v711 = vpop.permute.xlu0 %710
        %v713 = vsel %vm567, %v709, 0
        %v716 = vsel %vm567, %v711, 0
        %718 = vmatprep.subr.bf16.mxu0 0
        %719 = vmatpush1.bf16.xpose.msra.mxu0 %v716
        %720 = vmatprep.subr.bf16.mxu0 0
        %721 = vmatpush1.bf16.xpose.msra.mxu0 0
        %722 = vmatprep.subr.bf16.mxu0 0
        %723 = vmatpush1.bf16.xpose.msra.mxu0 0
        %724 = vmatprep.subr.bf16.mxu0 0
        %725 = vmatpush1.bf16.xpose.msra.mxu0 0
        %726 = vmatprep.subr.bf16.mxu0 0
        %727 = vmatpush1.bf16.xpose.msra.mxu0 0
        %728 = vmatprep.subr.bf16.mxu0 0
        %729 = vmatpush1.bf16.xpose.msra.mxu0 0
        %730 = vmatprep.subr.bf16.mxu0 0
        %731 = vmatpush1.bf16.xpose.msra.mxu0 0
        %732 = vmatprep.subr.bf16.mxu0 0
        %733 = vmatpush1.bf16.xpose.msra.mxu0 0
        %734 = vmatprep.subr.bf16.mxu0 0
        %735 = vmatpush1.bf16.xpose.msra.mxu0 0
        %736 = vmatprep.subr.bf16.mxu0 0
        %737 = vmatpush1.bf16.xpose.msra.mxu0 0
        %738 = vmatprep.subr.bf16.mxu0 0
        %739 = vmatpush1.bf16.xpose.msra.mxu0 0
        %740 = vmatprep.subr.bf16.mxu0 0
        %741 = vmatpush1.bf16.xpose.msra.mxu0 0
        %742 = vmatprep.subr.bf16.mxu0 0
        %743 = vmatpush1.bf16.xpose.msra.mxu0 0
        %744 = vmatprep.subr.bf16.mxu0 0
        %745 = vmatpush1.bf16.xpose.msra.mxu0 0
        %746 = vmatprep.subr.bf16.mxu0 0
        %747 = vmatpush1.bf16.xpose.msra.mxu0 0
        %748 = vmatprep.subr.bf16.mxu0 0
        %749 = vmatpush1.bf16.xpose.msra.mxu0 0
        %750 = vmatprep.mubr.bf16.mxu0 0
        %751 = vmatmul.mubr.bf16.gmra.mrb[0].mxu0 %v713
        %v752 = vpop.f32.mrb[0].mxu0
        %v753 = vadd.f32 %v706, %v752
        %v754 = vpop.f32.mrb[0].mxu0
        %v755 = vpop.f32.mrb[0].mxu0
        %v756 = vadd.f32 %v706, %v755
        %v757 = vpop.f32.mrb[0].mxu0
        %758 = vdwg.mxu0
        %v759 = vsel %vm615, %v753, -inf
        %760 = vmax.xlane.f32.xlu0 %v759
        %v761 = vpop.xlane.xlu0 %760
        %v762 = vsel %vm615, %v756, -inf
        %763 = vmax.xlane.f32.xlu0 %v762
        %v764 = vpop.xlane.xlu0 %763
        %v765 = vsub.f32 %v753, %v761
        %v766 = vsub.f32 %v756, %v764
        %v767 = vmul.f32 %v765, 1.442695
        %v768 = vpow.pop %v767
        %v769 = vmul.f32 %v766, 1.442695
        %v770 = vpow.pop %v769
        %v771 = vsel %vm615, %v768, 0.0
        %772 = vadd.xlane.f32.xlu0 %v771
        %v773 = vpop.xlane.xlu0 %772
        %v774 = vsel %vm615, %v770, 0.0
        %775 = vadd.xlane.f32.xlu0 %v774
        %v776 = vpop.xlane.xlu0 %775
        %v777 = vrcp.pop %v773
        %v778 = vrcp.pop %v776
        %v779 = vmul.f32 %v768, %v777
        %v780 = vmul.f32 %v770, %v778
        %v781 = vpack.c.bf16 %v780, %v779
        %782 = vrot.lane.b32.xlu0 %v556, 56
        %v783 = vpop.permute.xlu0 %782
        %v786 = vsel %vm615, %v781, 0
        %788 = vmatprep.subr.bf16.mxu0 0
        %789 = vmatpush1.bf16.msra.mxu0 %v783
        %790 = vmatprep.subr.bf16.mxu0 0
        %791 = vmatpush1.bf16.msra.mxu0 0
        %792 = vmatprep.subr.bf16.mxu0 0
        %793 = vmatpush1.bf16.msra.mxu0 0
        %794 = vmatprep.subr.bf16.mxu0 0
        %795 = vmatpush1.bf16.msra.mxu0 0
        %796 = vmatprep.subr.bf16.mxu0 0
        %797 = vmatpush1.bf16.msra.mxu0 0
        %798 = vmatprep.subr.bf16.mxu0 0
        %799 = vmatpush1.bf16.msra.mxu0 0
        %800 = vmatprep.subr.bf16.mxu0 0
        %801 = vmatpush1.bf16.msra.mxu0 0
        %802 = vmatprep.subr.bf16.mxu0 0
        %803 = vmatpush1.bf16.msra.mxu0 0
        %804 = vmatprep.subr.bf16.mxu0 0
        %805 = vmatpush1.bf16.msra.mxu0 0
        %806 = vmatprep.subr.bf16.mxu0 0
        %807 = vmatpush1.bf16.msra.mxu0 0
        %808 = vmatprep.subr.bf16.mxu0 0
        %809 = vmatpush1.bf16.msra.mxu0 0
        %810 = vmatprep.subr.bf16.mxu0 0
        %811 = vmatpush1.bf16.msra.mxu0 0
        %812 = vmatprep.subr.bf16.mxu0 0
        %813 = vmatpush1.bf16.msra.mxu0 0
        %814 = vmatprep.subr.bf16.mxu0 0
        %815 = vmatpush1.bf16.msra.mxu0 0
        %816 = vmatprep.subr.bf16.mxu0 0
        %817 = vmatpush1.bf16.msra.mxu0 0
        %818 = vmatprep.subr.bf16.mxu0 0
        %819 = vmatpush1.bf16.msra.mxu0 0
        %820 = vmatprep.mubr.bf16.mxu0 0
        %821 = vmatmul.mubr.bf16.gmra.mrb[0].mxu0 %v786
        %v822 = vpop.f32.mrb[0].mxu0
        %v823 = vadd.f32 0.0, %v822
        %v824 = vpop.f32.mrb[0].mxu0
        %v825 = vpop.f32.mrb[0].mxu0
        %v826 = vadd.f32 0.0, %v825
        %v827 = vpop.f32.mrb[0].mxu0
        %828 = vdwg.mxu0
        %s829 = scalar_lea.vmem %s449, 16
        %v830 = vld [vmem:[%s829] sm:$0xff]
        %v831 = vld [vmem:[%s829 + $0x8] sm:$0xff]
        %833 = vset.pattern.permute.xlu0 0
        %834 = vperm.xlu0 %833, %v830
        %v835 = vpop.permute.xlu0 %834
        %838 = vset.pattern.permute.xlu0 0
        %839 = vperm.xlu0 %838, %v831
        %v840 = vpop.permute.xlu0 %839
        %v842 = vmul.f32 %v823, %v835
        %v843 = vmul.f32 %v826, %v840
        %s844 = scalar_lea.vmem %s444, 2
        %v845 = vld [vmem:[%s844] sm:$0x1]
        %v847 = vlaneseq
        %v848 = vshrl.u32 %v847, 7
        %v849 = vsub.s32 0, %v848
        %v850 = vrot.slane %v845, %v849
        %852 = vrot.lane.b32.xlu0 %v556, 112
        %v853 = vpop.permute.xlu0 %852
        %854 = vrot.lane.b32.xlu0 %v556, 80
        %v855 = vpop.permute.xlu0 %854
        %v857 = vsel %vm567, %v853, 0
        %v860 = vsel %vm567, %v855, 0
        %862 = vmatprep.subr.bf16.mxu0 0
        %863 = vmatpush1.bf16.xpose.msra.mxu0 %v860
        %864 = vmatprep.subr.bf16.mxu0 0
        %865 = vmatpush1.bf16.xpose.msra.mxu0 0
        %866 = vmatprep.subr.bf16.mxu0 0
        %867 = vmatpush1.bf16.xpose.msra.mxu0 0
        %868 = vmatprep.subr.bf16.mxu0 0
        %869 = vmatpush1.bf16.xpose.msra.mxu0 0
        %870 = vmatprep.subr.bf16.mxu0 0
        %871 = vmatpush1.bf16.xpose.msra.mxu0 0
        %872 = vmatprep.subr.bf16.mxu0 0
        %873 = vmatpush1.bf16.xpose.msra.mxu0 0
        %874 = vmatprep.subr.bf16.mxu0 0
        %875 = vmatpush1.bf16.xpose.msra.mxu0 0
        %876 = vmatprep.subr.bf16.mxu0 0
        %877 = vmatpush1.bf16.xpose.msra.mxu0 0
        %878 = vmatprep.subr.bf16.mxu0 0
        %879 = vmatpush1.bf16.xpose.msra.mxu0 0
        %880 = vmatprep.subr.bf16.mxu0 0
        %881 = vmatpush1.bf16.xpose.msra.mxu0 0
        %882 = vmatprep.subr.bf16.mxu0 0
        %883 = vmatpush1.bf16.xpose.msra.mxu0 0
        %884 = vmatprep.subr.bf16.mxu0 0
        %885 = vmatpush1.bf16.xpose.msra.mxu0 0
        %886 = vmatprep.subr.bf16.mxu0 0
        %887 = vmatpush1.bf16.xpose.msra.mxu0 0
        %888 = vmatprep.subr.bf16.mxu0 0
        %889 = vmatpush1.bf16.xpose.msra.mxu0 0
        %890 = vmatprep.subr.bf16.mxu0 0
        %891 = vmatpush1.bf16.xpose.msra.mxu0 0
        %892 = vmatprep.subr.bf16.mxu0 0
        %893 = vmatpush1.bf16.xpose.msra.mxu0 0
        %894 = vmatprep.mubr.bf16.mxu0 0
        %895 = vmatmul.mubr.bf16.gmra.mrb[0].mxu0 %v857
        %v896 = vpop.f32.mrb[0].mxu0
        %v897 = vadd.f32 %v850, %v896
        %v898 = vpop.f32.mrb[0].mxu0
        %v899 = vpop.f32.mrb[0].mxu0
        %v900 = vadd.f32 %v850, %v899
        %v901 = vpop.f32.mrb[0].mxu0
        %902 = vdwg.mxu0
        %v903 = vsel %vm615, %v897, -inf
        %904 = vmax.xlane.f32.xlu0 %v903
        %v905 = vpop.xlane.xlu0 %904
        %v906 = vsel %vm615, %v900, -inf
        %907 = vmax.xlane.f32.xlu0 %v906
        %v908 = vpop.xlane.xlu0 %907
        %v909 = vsub.f32 %v897, %v905
        %v910 = vsub.f32 %v900, %v908
        %v911 = vmul.f32 %v909, 1.442695
        %v912 = vpow.pop %v911
        %v913 = vmul.f32 %v910, 1.442695
        %v914 = vpow.pop %v913
        %v915 = vsel %vm615, %v912, 0.0
        %916 = vadd.xlane.f32.xlu0 %v915
        %v917 = vpop.xlane.xlu0 %916
        %v918 = vsel %vm615, %v914, 0.0
        %919 = vadd.xlane.f32.xlu0 %v918
        %v920 = vpop.xlane.xlu0 %919
        %v921 = vrcp.pop %v917
        %v922 = vrcp.pop %v920
        %v923 = vmul.f32 %v912, %v921
        %v924 = vmul.f32 %v914, %v922
        %v925 = vpack.c.bf16 %v924, %v923
        %926 = vrot.lane.b32.xlu0 %v556, 48
        %v927 = vpop.permute.xlu0 %926
        %v930 = vsel %vm615, %v925, 0
        %932 = vmatprep.subr.bf16.mxu0 0
        %933 = vmatpush1.bf16.msra.mxu0 %v927
        %934 = vmatprep.subr.bf16.mxu0 0
        %935 = vmatpush1.bf16.msra.mxu0 0
        %936 = vmatprep.subr.bf16.mxu0 0
        %937 = vmatpush1.bf16.msra.mxu0 0
        %938 = vmatprep.subr.bf16.mxu0 0
        %939 = vmatpush1.bf16.msra.mxu0 0
        %940 = vmatprep.subr.bf16.mxu0 0
        %941 = vmatpush1.bf16.msra.mxu0 0
        %942 = vmatprep.subr.bf16.mxu0 0
        %943 = vmatpush1.bf16.msra.mxu0 0
        %944 = vmatprep.subr.bf16.mxu0 0
        %945 = vmatpush1.bf16.msra.mxu0 0
        %946 = vmatprep.subr.bf16.mxu0 0
        %947 = vmatpush1.bf16.msra.mxu0 0
        %948 = vmatprep.subr.bf16.mxu0 0
        %949 = vmatpush1.bf16.msra.mxu0 0
        %950 = vmatprep.subr.bf16.mxu0 0
        %951 = vmatpush1.bf16.msra.mxu0 0
        %952 = vmatprep.subr.bf16.mxu0 0
        %953 = vmatpush1.bf16.msra.mxu0 0
        %954 = vmatprep.subr.bf16.mxu0 0
        %955 = vmatpush1.bf16.msra.mxu0 0
        %956 = vmatprep.subr.bf16.mxu0 0
        %957 = vmatpush1.bf16.msra.mxu0 0
        %958 = vmatprep.subr.bf16.mxu0 0
        %959 = vmatpush1.bf16.msra.mxu0 0
        %960 = vmatprep.subr.bf16.mxu0 0
        %961 = vmatpush1.bf16.msra.mxu0 0
        %962 = vmatprep.subr.bf16.mxu0 0
        %963 = vmatpush1.bf16.msra.mxu0 0
        %964 = vmatprep.mubr.bf16.mxu0 0
        %965 = vmatmul.mubr.bf16.gmra.mrb[0].mxu0 %v930
        %v966 = vpop.f32.mrb[0].mxu0
        %v967 = vadd.f32 0.0, %v966
        %v968 = vpop.f32.mrb[0].mxu0
        %v969 = vpop.f32.mrb[0].mxu0
        %v970 = vadd.f32 0.0, %v969
        %v971 = vpop.f32.mrb[0].mxu0
        %972 = vdwg.mxu0
        %s973 = scalar_lea.vmem %s449, 32
        %v974 = vld [vmem:[%s973] sm:$0xff]
        %v975 = vld [vmem:[%s973 + $0x8] sm:$0xff]
        %977 = vset.pattern.permute.xlu0 0
        %978 = vperm.xlu0 %977, %v974
        %v979 = vpop.permute.xlu0 %978
        %982 = vset.pattern.permute.xlu0 0
        %983 = vperm.xlu0 %982, %v975
        %v984 = vpop.permute.xlu0 %983
        %v986 = vmul.f32 %v967, %v979
        %v987 = vmul.f32 %v970, %v984
        %s988 = scalar_lea.vmem %s444, 3
        %v989 = vld [vmem:[%s988] sm:$0x1]
        %v991 = vlaneseq
        %v992 = vshrl.u32 %v991, 7
        %v993 = vsub.s32 0, %v992
        %v994 = vrot.slane %v989, %v993
        %996 = vrot.lane.b32.xlu0 %v556, 104
        %v997 = vpop.permute.xlu0 %996
        %998 = vrot.lane.b32.xlu0 %v556, 72
        %v999 = vpop.permute.xlu0 %998
        %v1001 = vsel %vm567, %v997, 0
        %v1004 = vsel %vm567, %v999, 0
        %1006 = vmatprep.subr.bf16.mxu0 0
        %1007 = vmatpush1.bf16.xpose.msra.mxu0 %v1004
        %1008 = vmatprep.subr.bf16.mxu0 0
        %1009 = vmatpush1.bf16.xpose.msra.mxu0 0
        %1010 = vmatprep.subr.bf16.mxu0 0
        %1011 = vmatpush1.bf16.xpose.msra.mxu0 0
        %1012 = vmatprep.subr.bf16.mxu0 0
        %1013 = vmatpush1.bf16.xpose.msra.mxu0 0
        %1014 = vmatprep.subr.bf16.mxu0 0
        %1015 = vmatpush1.bf16.xpose.msra.mxu0 0
        %1016 = vmatprep.subr.bf16.mxu0 0
        %1017 = vmatpush1.bf16.xpose.msra.mxu0 0
        %1018 = vmatprep.subr.bf16.mxu0 0
        %1019 = vmatpush1.bf16.xpose.msra.mxu0 0
        %1020 = vmatprep.subr.bf16.mxu0 0
        %1021 = vmatpush1.bf16.xpose.msra.mxu0 0
        %1022 = vmatprep.subr.bf16.mxu0 0
        %1023 = vmatpush1.bf16.xpose.msra.mxu0 0
        %1024 = vmatprep.subr.bf16.mxu0 0
        %1025 = vmatpush1.bf16.xpose.msra.mxu0 0
        %1026 = vmatprep.subr.bf16.mxu0 0
        %1027 = vmatpush1.bf16.xpose.msra.mxu0 0
        %1028 = vmatprep.subr.bf16.mxu0 0
        %1029 = vmatpush1.bf16.xpose.msra.mxu0 0
        %1030 = vmatprep.subr.bf16.mxu0 0
        %1031 = vmatpush1.bf16.xpose.msra.mxu0 0
        %1032 = vmatprep.subr.bf16.mxu0 0
        %1033 = vmatpush1.bf16.xpose.msra.mxu0 0
        %1034 = vmatprep.subr.bf16.mxu0 0
        %1035 = vmatpush1.bf16.xpose.msra.mxu0 0
        %1036 = vmatprep.subr.bf16.mxu0 0
        %1037 = vmatpush1.bf16.xpose.msra.mxu0 0
        %1038 = vmatprep.mubr.bf16.mxu0 0
        %1039 = vmatmul.mubr.bf16.gmra.mrb[0].mxu0 %v1001
        %v1040 = vpop.f32.mrb[0].mxu0
        %v1041 = vadd.f32 %v994, %v1040
        %v1042 = vpop.f32.mrb[0].mxu0
        %v1043 = vpop.f32.mrb[0].mxu0
        %v1044 = vadd.f32 %v994, %v1043
        %v1045 = vpop.f32.mrb[0].mxu0
        %1046 = vdwg.mxu0
        %v1047 = vsel %vm615, %v1041, -inf
        %1048 = vmax.xlane.f32.xlu0 %v1047
        %v1049 = vpop.xlane.xlu0 %1048
        %v1050 = vsel %vm615, %v1044, -inf
        %1051 = vmax.xlane.f32.xlu0 %v1050
        %v1052 = vpop.xlane.xlu0 %1051
        %v1053 = vsub.f32 %v1041, %v1049
        %v1054 = vsub.f32 %v1044, %v1052
        %v1055 = vmul.f32 %v1053, 1.442695
        %v1056 = vpow.pop %v1055
        %v1057 = vmul.f32 %v1054, 1.442695
        %v1058 = vpow.pop %v1057
        %v1059 = vsel %vm615, %v1056, 0.0
        %1060 = vadd.xlane.f32.xlu0 %v1059
        %v1061 = vpop.xlane.xlu0 %1060
        %v1062 = vsel %vm615, %v1058, 0.0
        %1063 = vadd.xlane.f32.xlu0 %v1062
        %v1064 = vpop.xlane.xlu0 %1063
        %v1065 = vrcp.pop %v1061
        %v1066 = vrcp.pop %v1064
        %v1067 = vmul.f32 %v1056, %v1065
        %v1068 = vmul.f32 %v1058, %v1066
        %v1069 = vpack.c.bf16 %v1068, %v1067
        %1070 = vrot.lane.b32.xlu0 %v556, 40
        %v1071 = vpop.permute.xlu0 %1070
        %v1074 = vsel %vm615, %v1069, 0
        %1076 = vmatprep.subr.bf16.mxu0 0
        %1077 = vmatpush1.bf16.msra.mxu0 %v1071
        %1078 = vmatprep.subr.bf16.mxu0 0
        %1079 = vmatpush1.bf16.msra.mxu0 0
        %1080 = vmatprep.subr.bf16.mxu0 0
        %1081 = vmatpush1.bf16.msra.mxu0 0
        %1082 = vmatprep.subr.bf16.mxu0 0
        %1083 = vmatpush1.bf16.msra.mxu0 0
        %1084 = vmatprep.subr.bf16.mxu0 0
        %1085 = vmatpush1.bf16.msra.mxu0 0
        %1086 = vmatprep.subr.bf16.mxu0 0
        %1087 = vmatpush1.bf16.msra.mxu0 0
        %1088 = vmatprep.subr.bf16.mxu0 0
        %1089 = vmatpush1.bf16.msra.mxu0 0
        %1090 = vmatprep.subr.bf16.mxu0 0
        %1091 = vmatpush1.bf16.msra.mxu0 0
        %1092 = vmatprep.subr.bf16.mxu0 0
        %1093 = vmatpush1.bf16.msra.mxu0 0
        %1094 = vmatprep.subr.bf16.mxu0 0
        %1095 = vmatpush1.bf16.msra.mxu0 0
        %1096 = vmatprep.subr.bf16.mxu0 0
        %1097 = vmatpush1.bf16.msra.mxu0 0
        %1098 = vmatprep.subr.bf16.mxu0 0
        %1099 = vmatpush1.bf16.msra.mxu0 0
        %1100 = vmatprep.subr.bf16.mxu0 0
        %1101 = vmatpush1.bf16.msra.mxu0 0
        %1102 = vmatprep.subr.bf16.mxu0 0
        %1103 = vmatpush1.bf16.msra.mxu0 0
        %1104 = vmatprep.subr.bf16.mxu0 0
        %1105 = vmatpush1.bf16.msra.mxu0 0
        %1106 = vmatprep.subr.bf16.mxu0 0
        %1107 = vmatpush1.bf16.msra.mxu0 0
        %1108 = vmatprep.mubr.bf16.mxu0 0
        %1109 = vmatmul.mubr.bf16.gmra.mrb[0].mxu0 %v1074
        %v1110 = vpop.f32.mrb[0].mxu0
        %v1111 = vadd.f32 0.0, %v1110
        %v1112 = vpop.f32.mrb[0].mxu0
        %v1113 = vpop.f32.mrb[0].mxu0
        %v1114 = vadd.f32 0.0, %v1113
        %v1115 = vpop.f32.mrb[0].mxu0
        %1116 = vdwg.mxu0
        %s1117 = scalar_lea.vmem %s449, 48
        %v1118 = vld [vmem:[%s1117] sm:$0xff]
        %v1119 = vld [vmem:[%s1117 + $0x8] sm:$0xff]
        %1121 = vset.pattern.permute.xlu0 0
        %1122 = vperm.xlu0 %1121, %v1118
        %v1123 = vpop.permute.xlu0 %1122
        %1126 = vset.pattern.permute.xlu0 0
        %1127 = vperm.xlu0 %1126, %v1119
        %v1128 = vpop.permute.xlu0 %1127
        %v1130 = vmul.f32 %v1111, %v1123
        %v1131 = vmul.f32 %v1114, %v1128
        %1134 = vrot.lane.b32.xlu0 %v842, 8
        %v1135 = vpop.permute.xlu0 %1134
        %1136 = vrot.lane.b32.xlu0 %v843, 8
        %v1137 = vpop.permute.xlu0 %1136
        %1142 = vrot.lane.b32.xlu0 %v986, 16
        %v1143 = vpop.permute.xlu0 %1142
        %1144 = vrot.lane.b32.xlu0 %v987, 16
        %v1145 = vpop.permute.xlu0 %1144
        %1150 = vrot.lane.b32.xlu0 %v1130, 24
        %v1151 = vpop.permute.xlu0 %1150
        %1152 = vrot.lane.b32.xlu0 %v1131, 24
        %v1153 = vpop.permute.xlu0 %1152
        %v1156 = vsel %vm567, %v698, %v1135
        %v1157 = vsel %vm567, %v699, %v1137
        %v1158 = vsel %vm615, %v1156, %v1143
        %v1159 = vsel %vm615, %v1157, %v1145
        %vm1160 = vcmask 195584
        %v1161 = vsel %vm1160, %v1158, %v1151
        %v1162 = vsel %vm1160, %v1159, %v1153
        %v1163 = vpack.c.bf16 %v1162, %v1161
        %v1164 = vld [vmem:[%s8] sm:$0xf]
        %v1165 = vld [vmem:[%s8 + $0x4] sm:$0xf]
        %v1166 = vld [vmem:[%s8 + $0x8] sm:$0xf]
        %v1167 = vld [vmem:[%s8 + $0xc] sm:$0xf]
        %v1168 = vld [vmem:[%s9] sm:$0x1]
        %v1169 = vld [vmem:[%s454] sm:$0xff]
        %v1170 = vld [vmem:[%s454 + $0x8] sm:$0xff]
        %v1172 = vlaneseq
        %v1173 = vshrl.u32 %v1172, 7
        %v1174 = vsub.s32 0, %v1173
        %v1175 = vrot.slane %v1168, %v1174
        %1178 = vset.pattern.permute.xlu0 0
        %1179 = vperm.xlu0 %1178, %v1169
        %v1180 = vpop.permute.xlu0 %1179
        %1183 = vset.pattern.permute.xlu0 0
        %1184 = vperm.xlu0 %1183, %v1170
        %v1185 = vpop.permute.xlu0 %1184
        %v1187 = vmul.f32 %v1175, %v1180
        %v1188 = vmul.f32 %v1175, %v1185
        %v1193 = vunpack.c.l.b16 %v1164
        %v1194 = vunpack.c.l.b16 %v1165
        %v1195 = vunpack.c.l.b16 %v1166
        %v1196 = vunpack.c.l.b16 %v1167
        %v1197 = vpack.c.b16 %v1194, %v1193
        %v1198 = vpack.c.b16 %v1196, %v1195
        %v1202 = vsel %vm499, %v1163, 0
        %1204 = vmatprep.subr.bf16.mxu0 0
        %1205 = vmatpush1.bf16.msra.mxu0 %v1197
        %1206 = vmatprep.subr.bf16.mxu0 0
        %1207 = vmatpush1.bf16.msra.mxu0 %v1198
        %1208 = vmatprep.subr.bf16.mxu0 0
        %1209 = vmatpush1.bf16.msra.mxu0 0
        %1210 = vmatprep.subr.bf16.mxu0 0
        %1211 = vmatpush1.bf16.msra.mxu0 0
        %1212 = vmatprep.subr.bf16.mxu0 0
        %1213 = vmatpush1.bf16.msra.mxu0 0
        %1214 = vmatprep.subr.bf16.mxu0 0
        %1215 = vmatpush1.bf16.msra.mxu0 0
        %1216 = vmatprep.subr.bf16.mxu0 0
        %1217 = vmatpush1.bf16.msra.mxu0 0
        %1218 = vmatprep.subr.bf16.mxu0 0
        %1219 = vmatpush1.bf16.msra.mxu0 0
        %1220 = vmatprep.subr.bf16.mxu0 0
        %1221 = vmatpush1.bf16.msra.mxu0 0
        %1222 = vmatprep.subr.bf16.mxu0 0
        %1223 = vmatpush1.bf16.msra.mxu0 0
        %1224 = vmatprep.subr.bf16.mxu0 0
        %1225 = vmatpush1.bf16.msra.mxu0 0
        %1226 = vmatprep.subr.bf16.mxu0 0
        %1227 = vmatpush1.bf16.msra.mxu0 0
        %1228 = vmatprep.subr.bf16.mxu0 0
        %1229 = vmatpush1.bf16.msra.mxu0 0
        %1230 = vmatprep.subr.bf16.mxu0 0
        %1231 = vmatpush1.bf16.msra.mxu0 0
        %1232 = vmatprep.subr.bf16.mxu0 0
        %1233 = vmatpush1.bf16.msra.mxu0 0
        %1234 = vmatprep.subr.bf16.mxu0 0
        %1235 = vmatpush1.bf16.msra.mxu0 0
        %1236 = vmatprep.mubr.bf16.mxu0 0
        %1237 = vmatmul.mubr.bf16.gmra.mrb[0].mxu0 %v1202
        %v1238 = vpop.f32.mrb[0].mxu0
        %v1239 = vadd.f32 %v1187, %v1238
        %v1240 = vpop.f32.mrb[0].mxu0
        %v1241 = vpop.f32.mrb[0].mxu0
        %v1242 = vadd.f32 %v1188, %v1241
        %v1243 = vpop.f32.mrb[0].mxu0
        %1244 = vdwg.mxu0
        %1245 = vst [vmem:[%s425] sm:$0xff] %v1239
        %1246 = vst [vmem:[%s425 + $0x8] sm:$0xff] %v1242
        %s1247 = sand.u32 %s272, 1
        %s1248 = scalar_lea.sflag [#allocation3], %s1247
        %s1249 = sand.u32 %s272, 1
        %s1250 = smul.addr %s1249, 16
        %s1251 = scalar_lea.vmem [#allocation2], %s1250
        // Predicated region
        $region61: #{sparse_self_attention_forward.1} parent=59 // pred_check
          %p1252 = pneg %p282
        $region62: #{sparse_self_attention_forward.1} parent=59 // pred_check_branch
          %1254 = sbr.rel (%p1252) target = $region64
        $region63: #{sparse_self_attention_forward.1} parent=59 // pred_region
          %s1256 = ssub.s32 256, 256
          %1257 = vsyncadd %s1248, %s1256
          %s1258 = smul.addr %s24, 2
          %s1259 = smul.addr %s1258, 128
          %s1260 = scalar_lea.hbm %s10, %s1259
          %s1261 = sshll.u32 %s1251, 4
          %s1262 = int_to_ptr.vmem [resolvable:$true] %s1261
          %1267 = dma.vmem_to_hbm [thread:$0]  %s1262, 256, %s1260, %s1248, 128, 128, 8
        $region64: #{sparse_self_attention_forward.1} parent=59 // pred_fallthru
          _
      $region60: #{sparse_self_attention_forward.1} parent=5 // pred_fallthru
        _
      %p1268 = scmp.le.s32.totalorder 2, %s19
      // Predicated region
      $region65: #{sparse_self_attention_forward.1} parent=5 // pred_check
        %p1269 = pneg %p1268
      $region66: #{sparse_self_attention_forward.1} parent=5 // pred_check_branch
        %1271 = sbr.rel (%p1269) target = $region68
      $region67: #{sparse_self_attention_forward.1} parent=5 // pred_region
        %s1272 = ssub.s32 %s19, 2
        // Predicated region
        $region69: #{sparse_self_attention_forward.1} parent=67 // pred_check
          %p1273 = pneg %p288
        $region70: #{sparse_self_attention_forward.1} parent=67 // pred_check_branch
          %1275 = sbr.rel (%p1273) target = $region72
        $region71: #{sparse_self_attention_forward.1} parent=67 // pred_region
          %s1276 = sand.u32 %s273, 1
          %s1277 = scalar_lea.sflag [#allocation3], %s1276
          %s1278 = sand.u32 %s273, 1
          %s1279 = smul.addr %s1278, 16
          %s1280 = scalar_lea.vmem [#allocation2], %s1279
          %1281 = dma.done %s1277, 256
        $region72: #{sparse_self_attention_forward.1} parent=67 // pred_fallthru
          _
      $region68: #{sparse_self_attention_forward.1} parent=5 // pred_fallthru
        _
    $region6: #{sparse_self_attention_forward.1} parent=1 // loop_footer
      %s23 = sadd.s32 1, %s19
    $region7: #{sparse_self_attention_forward.1} parent=1 // loop_footer_branch
      %18 = sbr.rel target = $region3
    $region8: #{sparse_self_attention_forward.1} parent=1 // loop_exit
      _
    %1282 = vsyncpa [#allocation3], 1
    %s1283 = scalar_lea.sflag [#allocation3], 1
    %1284 = vsyncpa %s1283, 1

</llo_original>
